<compile_context>
chip_gen: v5e
topology: v5e:2x2
jax: 0.10.0
libtpu: 0.0.40
codegen_flags: <defaults>
</compile_context>

<pallas_src>
import math

import jax
import jax.numpy as jnp
from jax.experimental import pallas as pl
from jax.experimental.pallas import tpu as pltpu

# ---- model config (small, consistent with the module) ----
B = 2          # batch
T = 8          # sequence length (== block_size here)
N_EMBED = 32   # C
N_HEAD = 4     # H
HEAD_DIM = N_EMBED // N_HEAD

NEG_INF = -1e30  # finite large-negative mask (safer than -inf through exp)


def causal_attn_kernel(x_ref, mask_ref, wq_ref, wk_ref, wv_ref,
                       bq_ref, bk_ref, bv_ref, wp_ref, bp_ref, o_ref):
    """One grid step: BB batch elements stacked along rows.

    x_ref:    (BB*T, C)      input rows
    mask_ref: (BB*T, BB*T)   additive mask: 0 where attend allowed, -1e30 otherwise
                             (block-diagonal over batch segments AND causal)
    wq/wk/wv_ref: (H, C, D)  per-head projection weights (pre-transposed; Q pre-scaled)
    bq/bk/bv_ref: (H, 1, D)  per-head biases (Q bias pre-scaled)
    wp_ref:   (H, D, C)      per-head row-slices of the (transposed) output projection
    bp_ref:   (1, C)         output-projection bias
    o_ref:    (BB*T, C)
    """
    x2 = x_ref[...]                       # (BT, C)
    mask_bias = mask_ref[...]             # (BT, BT)
    H = wq_ref.shape[0]

    out = bp_ref[...]                     # (1, C); broadcasts against (BT, C)
    for h in range(H):                    # static unroll over heads
        qh = jnp.dot(x2, wq_ref[h], preferred_element_type=jnp.float32) + bq_ref[h]  # (BT, D)
        kh = jnp.dot(x2, wk_ref[h], preferred_element_type=jnp.float32) + bk_ref[h]  # (BT, D)
        vh = jnp.dot(x2, wv_ref[h], preferred_element_type=jnp.float32) + bv_ref[h]  # (BT, D)

        # scores = q @ k.T without materializing a transpose (contract last dims).
        att = jnp.einsum('td,sd->ts', qh, kh,
                         preferred_element_type=jnp.float32)                          # (BT, BT)
        att = jax.nn.softmax(att + mask_bias, axis=-1)

        yh = jnp.dot(att, vh, preferred_element_type=jnp.float32)                     # (BT, D)
        # Fold "concat heads + c_proj" into an accumulation: out += y_h @ Wproj_h.
        out = out + jnp.dot(yh, wp_ref[h], preferred_element_type=jnp.float32)        # (BT, C)

    o_ref[...] = out.astype(o_ref.dtype)


def _default_batches_per_step(batch):
    """v7x has 2 TensorCores per chip: keep grid=(B,) parallel so both are used.
    v5e/v6e have a single TC: fuse the whole batch into one grid step."""
    try:
        kind = jax.devices()[0].device_kind.lower()
    except Exception:
        kind = ""
    if "v7" in kind or "7x" in kind or "tpu7" in kind:
        return 1
    return batch


def causal_self_attention(x, w_attn, b_attn, w_proj, b_proj,
                          n_head=N_HEAD, batches_per_step=None):
    """x: (B, T, C) float32 -> (B, T, C) float32. Matches the PyTorch forward."""
    Bt, Tt, Ct = x.shape
    H = n_head
    D = Ct // H
    scale = 1.0 / math.sqrt(D)

    # ---- trace-time weight preparation (runs once, outside the kernel) ----
    # nn.Linear(n_embed, 3*n_embed): w_attn is (3C, C); rows [0:C)=Q, [C:2C)=K, [2C:3C)=V.
    wq = (w_attn[0 * Ct:1 * Ct, :].T * scale).reshape(Ct, H, D).transpose(1, 0, 2)  # (H, C, D)
    wk = w_attn[1 * Ct:2 * Ct, :].T.reshape(Ct, H, D).transpose(1, 0, 2)            # (H, C, D)
    wv = w_attn[2 * Ct:3 * Ct, :].T.reshape(Ct, H, D).transpose(1, 0, 2)            # (H, C, D)
    bq = (b_attn[0 * Ct:1 * Ct] * scale).reshape(H, 1, D)
    bk = b_attn[1 * Ct:2 * Ct].reshape(H, 1, D)
    bv = b_attn[2 * Ct:3 * Ct].reshape(H, 1, D)
    wp = w_proj.T.reshape(H, D, Ct)          # (H, D, C): per-head rows of c_proj
    bp = b_proj.reshape(1, Ct)

    if batches_per_step is None:
        batches_per_step = _default_batches_per_step(Bt)
    BB = int(batches_per_step)
    assert Bt % BB == 0, "batch must be divisible by batches_per_step"
    grid = (Bt // BB,)
    rows = BB * Tt

    # Additive segment+causal mask (like the PyTorch `bias` buffer), trace-time only.
    idx = jnp.arange(rows)
    same_seg = (idx[:, None] // Tt) == (idx[None, :] // Tt)
    causal = idx[None, :] <= idx[:, None]
    mask_bias = jnp.where(same_seg & causal, 0.0, NEG_INF).astype(jnp.float32)  # (rows, rows)

    # Flatten to a lane-friendly 2-D slab; reshapes here are free wrapper plumbing.
    x2 = x.reshape(Bt * Tt, Ct)

    out2 = pl.pallas_call(
        causal_attn_kernel,
        out_shape=jax.ShapeDtypeStruct((Bt * Tt, Ct), x.dtype),
        grid_spec=pltpu.PrefetchScalarGridSpec(
            num_scalar_prefetch=0,
            grid=grid,
            in_specs=[
                pl.BlockSpec((rows, Ct), lambda g: (g, 0)),        # x rows
                pl.BlockSpec((rows, rows), lambda g: (0, 0)),      # additive mask
                pl.BlockSpec((H, Ct, D), lambda g: (0, 0, 0)),     # Wq (head-split)
                pl.BlockSpec((H, Ct, D), lambda g: (0, 0, 0)),     # Wk
                pl.BlockSpec((H, Ct, D), lambda g: (0, 0, 0)),     # Wv
                pl.BlockSpec((H, 1, D), lambda g: (0, 0, 0)),      # bq
                pl.BlockSpec((H, 1, D), lambda g: (0, 0, 0)),      # bk
                pl.BlockSpec((H, 1, D), lambda g: (0, 0, 0)),      # bv
                pl.BlockSpec((H, D, Ct), lambda g: (0, 0, 0)),     # Wproj (head-split)
                pl.BlockSpec((1, Ct), lambda g: (0, 0)),           # bproj
            ],
            out_specs=pl.BlockSpec((rows, Ct), lambda g: (g, 0)),
        ),
        compiler_params=pltpu.CompilerParams(
            dimension_semantics=("parallel",)),
    )(x2, mask_bias, wq, wk, wv, bq, bk, bv, wp, bp)

    return out2.reshape(Bt, Tt, Ct)


def reference(x, w_attn, b_attn, w_proj, b_proj):
    """Pure-JAX reference mirroring the PyTorch forward."""
    Bt, Tt, Ct = x.shape
    H, D = N_HEAD, HEAD_DIM
    qkv = x @ w_attn.T + b_attn
    q, k, v = jnp.split(qkv, 3, axis=2)
    q = q.reshape(Bt, Tt, H, D).transpose(0, 2, 1, 3)
    k = k.reshape(Bt, Tt, H, D).transpose(0, 2, 1, 3)
    v = v.reshape(Bt, Tt, H, D).transpose(0, 2, 1, 3)
    att = (q @ k.transpose(0, 1, 3, 2)) * (1.0 / math.sqrt(D))
    mask = jnp.tril(jnp.ones((Tt, Tt), dtype=bool))
    att = jnp.where(mask[None, None], att, -jnp.inf)
    att = jax.nn.softmax(att, axis=-1)
    y = att @ v
    y = y.transpose(0, 2, 1, 3).reshape(Bt, Tt, Ct)
    return y @ w_proj.T + b_proj


if __name__ == "__main__":
    key = jax.random.PRNGKey(0)
    kx, kw1, kb1, kw2, kb2 = jax.random.split(key, 5)

    x = jax.random.normal(kx, (B, T, N_EMBED), dtype=jnp.float32)
    # nn.Linear(n_embed, 3*n_embed): weight (3C, C), bias (3C,)
    w_attn = 0.02 * jax.random.normal(kw1, (3 * N_EMBED, N_EMBED), dtype=jnp.float32)
    b_attn = 0.02 * jax.random.normal(kb1, (3 * N_EMBED,), dtype=jnp.float32)
    # nn.Linear(n_embed, n_embed): weight (C, C), bias (C,)
    w_proj = 0.02 * jax.random.normal(kw2, (N_EMBED, N_EMBED), dtype=jnp.float32)
    b_proj = 0.02 * jax.random.normal(kb2, (N_EMBED,), dtype=jnp.float32)

    out = causal_self_attention(x, w_attn, b_attn, w_proj, b_proj)
    out = jax.block_until_ready(out)

    ref = reference(x, w_attn, b_attn, w_proj, b_proj)
    assert out.shape == (B, T, N_EMBED)
    assert jnp.allclose(out, ref, atol=1e-4, rtol=1e-4), "mismatch vs JAX reference"

    print("KERNEL_OK")
</pallas_src>

<mosaic_0001>
module attributes {stable_mosaic.version = 11 : i64} {
  func.func @causal_attn_kernel(%arg0: i32, %arg1: memref<16x32xf32, #tpu.memory_space<vmem>>, %arg2: memref<16x16xf32, #tpu.memory_space<vmem>>, %arg3: memref<4x32x8xf32, #tpu.memory_space<vmem>>, %arg4: memref<4x32x8xf32, #tpu.memory_space<vmem>>, %arg5: memref<4x32x8xf32, #tpu.memory_space<vmem>>, %arg6: memref<4x1x8xf32, #tpu.memory_space<vmem>>, %arg7: memref<4x1x8xf32, #tpu.memory_space<vmem>>, %arg8: memref<4x1x8xf32, #tpu.memory_space<vmem>>, %arg9: memref<4x8x32xf32, #tpu.memory_space<vmem>>, %arg10: memref<1x32xf32, #tpu.memory_space<vmem>>, %arg11: memref<16x32xf32, #tpu.memory_space<vmem>>) attributes {dimension_semantics = [#tpu.dimension_semantics<parallel>], iteration_bounds = array<i64: 1>, scalar_prefetch = 0 : i64, scratch_operands = 0 : i64, tpu.core_type = #tpu.core_type<tc>, window_params = [{transform_indices = @transform_0, window_bounds = array<i64: 16, 32>}, {pipeline_mode = #tpu.pipeline_mode<synchronous>, transform_indices = @transform_1, window_bounds = array<i64: 16, 16>}, {pipeline_mode = #tpu.pipeline_mode<synchronous>, transform_indices = @transform_2, window_bounds = array<i64: 4, 32, 8>}, {pipeline_mode = #tpu.pipeline_mode<synchronous>, transform_indices = @transform_3, window_bounds = array<i64: 4, 32, 8>}, {pipeline_mode = #tpu.pipeline_mode<synchronous>, transform_indices = @transform_4, window_bounds = array<i64: 4, 32, 8>}, {pipeline_mode = #tpu.pipeline_mode<synchronous>, transform_indices = @transform_5, window_bounds = array<i64: 4, 1, 8>}, {pipeline_mode = #tpu.pipeline_mode<synchronous>, transform_indices = @transform_6, window_bounds = array<i64: 4, 1, 8>}, {pipeline_mode = #tpu.pipeline_mode<synchronous>, transform_indices = @transform_7, window_bounds = array<i64: 4, 1, 8>}, {pipeline_mode = #tpu.pipeline_mode<synchronous>, transform_indices = @transform_8, window_bounds = array<i64: 4, 8, 32>}, {pipeline_mode = #tpu.pipeline_mode<synchronous>, transform_indices = @transform_9, window_bounds = array<i64: 1, 32>}, {transform_indices = @transform_10, window_bounds = array<i64: 16, 32>}]} {
    %c0 = arith.constant 0 : index
    %c0_0 = arith.constant 0 : index
    %0 = vector.load %arg1[%c0, %c0_0] : memref<16x32xf32, #tpu.memory_space<vmem>>, vector<16x32xf32>
    %c0_1 = arith.constant 0 : index
    %c0_2 = arith.constant 0 : index
    %1 = vector.load %arg2[%c0_1, %c0_2] : memref<16x16xf32, #tpu.memory_space<vmem>>, vector<16x16xf32>
    %c0_3 = arith.constant 0 : index
    %c0_4 = arith.constant 0 : index
    %2 = vector.load %arg10[%c0_3, %c0_4] : memref<1x32xf32, #tpu.memory_space<vmem>>, vector<1x32xf32>
    %c0_5 = arith.constant 0 : index
    %c0_6 = arith.constant 0 : index
    %c0_7 = arith.constant 0 : index
    %3 = vector.load %arg3[%c0_5, %c0_6, %c0_7] : memref<4x32x8xf32, #tpu.memory_space<vmem>>, vector<1x32x8xf32>
    %4 = vector.shape_cast %3 : vector<1x32x8xf32> to vector<32x8xf32>
    %cst = arith.constant dense<0.000000e+00> : vector<16x8xf32>
    %5 = tpu.matmul %0, %4, %cst {dimension_numbers = #tpu.dot_dimension_numbers<[1], [0], [0], [1], [0, 0, 1, 1], [], []>} : vector<16x32xf32>, vector<32x8xf32>, vector<16x8xf32> -> vector<16x8xf32>
    %c0_8 = arith.constant 0 : index
    %c0_9 = arith.constant 0 : index
    %c0_10 = arith.constant 0 : index
    %6 = vector.load %arg6[%c0_8, %c0_9, %c0_10] : memref<4x1x8xf32, #tpu.memory_space<vmem>>, vector<1x1x8xf32>
    %7 = vector.shape_cast %6 : vector<1x1x8xf32> to vector<1x8xf32>
    %8 = vector.broadcast %7 : vector<1x8xf32> to vector<16x8xf32>
    %9 = arith.addf %5, %8 : vector<16x8xf32>
    %c0_11 = arith.constant 0 : index
    %c0_12 = arith.constant 0 : index
    %c0_13 = arith.constant 0 : index
    %10 = vector.load %arg4[%c0_11, %c0_12, %c0_13] : memref<4x32x8xf32, #tpu.memory_space<vmem>>, vector<1x32x8xf32>
    %11 = vector.shape_cast %10 : vector<1x32x8xf32> to vector<32x8xf32>
    %cst_14 = arith.constant dense<0.000000e+00> : vector<16x8xf32>
    %12 = tpu.matmul %0, %11, %cst_14 {dimension_numbers = #tpu.dot_dimension_numbers<[1], [0], [0], [1], [0, 0, 1, 1], [], []>} : vector<16x32xf32>, vector<32x8xf32>, vector<16x8xf32> -> vector<16x8xf32>
    %c0_15 = arith.constant 0 : index
    %c0_16 = arith.constant 0 : index
    %c0_17 = arith.constant 0 : index
    %13 = vector.load %arg7[%c0_15, %c0_16, %c0_17] : memref<4x1x8xf32, #tpu.memory_space<vmem>>, vector<1x1x8xf32>
    %14 = vector.shape_cast %13 : vector<1x1x8xf32> to vector<1x8xf32>
    %15 = vector.broadcast %14 : vector<1x8xf32> to vector<16x8xf32>
    %16 = arith.addf %12, %15 : vector<16x8xf32>
    %c0_18 = arith.constant 0 : index
    %c0_19 = arith.constant 0 : index
    %c0_20 = arith.constant 0 : index
    %17 = vector.load %arg5[%c0_18, %c0_19, %c0_20] : memref<4x32x8xf32, #tpu.memory_space<vmem>>, vector<1x32x8xf32>
    %18 = vector.shape_cast %17 : vector<1x32x8xf32> to vector<32x8xf32>
    %cst_21 = arith.constant dense<0.000000e+00> : vector<16x8xf32>
    %19 = tpu.matmul %0, %18, %cst_21 {dimension_numbers = #tpu.dot_dimension_numbers<[1], [0], [0], [1], [0, 0, 1, 1], [], []>} : vector<16x32xf32>, vector<32x8xf32>, vector<16x8xf32> -> vector<16x8xf32>
    %c0_22 = arith.constant 0 : index
    %c0_23 = arith.constant 0 : index
    %c0_24 = arith.constant 0 : index
    %20 = vector.load %arg8[%c0_22, %c0_23, %c0_24] : memref<4x1x8xf32, #tpu.memory_space<vmem>>, vector<1x1x8xf32>
    %21 = vector.shape_cast %20 : vector<1x1x8xf32> to vector<1x8xf32>
    %22 = vector.broadcast %21 : vector<1x8xf32> to vector<16x8xf32>
    %23 = arith.addf %19, %22 : vector<16x8xf32>
    "tpu.trace_start"() <{level = 10 : i32, message = "td,sd->ts"}> : () -> ()
    %cst_25 = arith.constant dense<0.000000e+00> : vector<16x16xf32>
    %24 = tpu.matmul %9, %16, %cst_25 {dimension_numbers = #tpu.dot_dimension_numbers<[1], [1], [0], [0], [0, 0, 1, 0], [], []>} : vector<16x8xf32>, vector<16x8xf32>, vector<16x16xf32> -> vector<16x16xf32>
    "tpu.trace_stop"() : () -> ()
    %25 = arith.addf %24, %1 : vector<16x16xf32>
    %cst_26 = arith.constant dense<0xFF800000> : vector<16xf32>
    %26 = vector.multi_reduction <maximumf>, %25, %cst_26 [1] : vector<16x16xf32> to vector<16xf32>
    %cst_27 = arith.constant 0xFF800000 : f32
    %27 = vector.broadcast %cst_27 : f32 to vector<16xf32>
    %28 = arith.maximumf %27, %26 : vector<16xf32>
    %29 = vector.shape_cast %28 : vector<16xf32> to vector<16x1xf32>
    %30 = vector.broadcast %29 : vector<16x1xf32> to vector<16x16xf32>
    %31 = arith.subf %25, %30 : vector<16x16xf32>
    %32 = math.exp %31 : vector<16x16xf32>
    %cst_28 = arith.constant dense<0.000000e+00> : vector<16xf32>
    %33 = vector.multi_reduction <add>, %32, %cst_28 [1] : vector<16x16xf32> to vector<16xf32>
    %34 = vector.shape_cast %33 : vector<16xf32> to vector<16x1xf32>
    %35 = vector.broadcast %34 : vector<16x1xf32> to vector<16x16xf32>
    %36 = arith.divf %32, %35 : vector<16x16xf32>
    %cst_29 = arith.constant dense<0.000000e+00> : vector<16x8xf32>
    %37 = tpu.matmul %36, %23, %cst_29 {dimension_numbers = #tpu.dot_dimension_numbers<[1], [0], [0], [1], [0, 0, 1, 1], [], []>} : vector<16x16xf32>, vector<16x8xf32>, vector<16x8xf32> -> vector<16x8xf32>
    %c0_30 = arith.constant 0 : index
    %c0_31 = arith.constant 0 : index
    %c0_32 = arith.constant 0 : index
    %38 = vector.load %arg9[%c0_30, %c0_31, %c0_32] : memref<4x8x32xf32, #tpu.memory_space<vmem>>, vector<1x8x32xf32>
    %39 = vector.shape_cast %38 : vector<1x8x32xf32> to vector<8x32xf32>
    %cst_33 = arith.constant dense<0.000000e+00> : vector<16x32xf32>
    %40 = tpu.matmul %37, %39, %cst_33 {dimension_numbers = #tpu.dot_dimension_numbers<[1], [0], [0], [1], [0, 0, 1, 1], [], []>} : vector<16x8xf32>, vector<8x32xf32>, vector<16x32xf32> -> vector<16x32xf32>
    %41 = vector.broadcast %2 : vector<1x32xf32> to vector<16x32xf32>
    %42 = arith.addf %41, %40 : vector<16x32xf32>
    %c1 = arith.constant 1 : index
    %c0_34 = arith.constant 0 : index
    %c0_35 = arith.constant 0 : index
    %43 = vector.load %arg3[%c1, %c0_34, %c0_35] : memref<4x32x8xf32, #tpu.memory_space<vmem>>, vector<1x32x8xf32>
    %44 = vector.shape_cast %43 : vector<1x32x8xf32> to vector<32x8xf32>
    %cst_36 = arith.constant dense<0.000000e+00> : vector<16x8xf32>
    %45 = tpu.matmul %0, %44, %cst_36 {dimension_numbers = #tpu.dot_dimension_numbers<[1], [0], [0], [1], [0, 0, 1, 1], [], []>} : vector<16x32xf32>, vector<32x8xf32>, vector<16x8xf32> -> vector<16x8xf32>
    %c1_37 = arith.constant 1 : index
    %c0_38 = arith.constant 0 : index
    %c0_39 = arith.constant 0 : index
    %46 = vector.load %arg6[%c1_37, %c0_38, %c0_39] : memref<4x1x8xf32, #tpu.memory_space<vmem>>, vector<1x1x8xf32>
    %47 = vector.shape_cast %46 : vector<1x1x8xf32> to vector<1x8xf32>
    %48 = vector.broadcast %47 : vector<1x8xf32> to vector<16x8xf32>
    %49 = arith.addf %45, %48 : vector<16x8xf32>
    %c1_40 = arith.constant 1 : index
    %c0_41 = arith.constant 0 : index
    %c0_42 = arith.constant 0 : index
    %50 = vector.load %arg4[%c1_40, %c0_41, %c0_42] : memref<4x32x8xf32, #tpu.memory_space<vmem>>, vector<1x32x8xf32>
    %51 = vector.shape_cast %50 : vector<1x32x8xf32> to vector<32x8xf32>
    %cst_43 = arith.constant dense<0.000000e+00> : vector<16x8xf32>
    %52 = tpu.matmul %0, %51, %cst_43 {dimension_numbers = #tpu.dot_dimension_numbers<[1], [0], [0], [1], [0, 0, 1, 1], [], []>} : vector<16x32xf32>, vector<32x8xf32>, vector<16x8xf32> -> vector<16x8xf32>
    %c1_44 = arith.constant 1 : index
    %c0_45 = arith.constant 0 : index
    %c0_46 = arith.constant 0 : index
    %53 = vector.load %arg7[%c1_44, %c0_45, %c0_46] : memref<4x1x8xf32, #tpu.memory_space<vmem>>, vector<1x1x8xf32>
    %54 = vector.shape_cast %53 : vector<1x1x8xf32> to vector<1x8xf32>
    %55 = vector.broadcast %54 : vector<1x8xf32> to vector<16x8xf32>
    %56 = arith.addf %52, %55 : vector<16x8xf32>
    %c1_47 = arith.constant 1 : index
    %c0_48 = arith.constant 0 : index
    %c0_49 = arith.constant 0 : index
    %57 = vector.load %arg5[%c1_47, %c0_48, %c0_49] : memref<4x32x8xf32, #tpu.memory_space<vmem>>, vector<1x32x8xf32>
    %58 = vector.shape_cast %57 : vector<1x32x8xf32> to vector<32x8xf32>
    %cst_50 = arith.constant dense<0.000000e+00> : vector<16x8xf32>
    %59 = tpu.matmul %0, %58, %cst_50 {dimension_numbers = #tpu.dot_dimension_numbers<[1], [0], [0], [1], [0, 0, 1, 1], [], []>} : vector<16x32xf32>, vector<32x8xf32>, vector<16x8xf32> -> vector<16x8xf32>
    %c1_51 = arith.constant 1 : index
    %c0_52 = arith.constant 0 : index
    %c0_53 = arith.constant 0 : index
    %60 = vector.load %arg8[%c1_51, %c0_52, %c0_53] : memref<4x1x8xf32, #tpu.memory_space<vmem>>, vector<1x1x8xf32>
    %61 = vector.shape_cast %60 : vector<1x1x8xf32> to vector<1x8xf32>
    %62 = vector.broadcast %61 : vector<1x8xf32> to vector<16x8xf32>
    %63 = arith.addf %59, %62 : vector<16x8xf32>
    "tpu.trace_start"() <{level = 10 : i32, message = "td,sd->ts"}> : () -> ()
    %cst_54 = arith.constant dense<0.000000e+00> : vector<16x16xf32>
    %64 = tpu.matmul %49, %56, %cst_54 {dimension_numbers = #tpu.dot_dimension_numbers<[1], [1], [0], [0], [0, 0, 1, 0], [], []>} : vector<16x8xf32>, vector<16x8xf32>, vector<16x16xf32> -> vector<16x16xf32>
    "tpu.trace_stop"() : () -> ()
    %65 = arith.addf %64, %1 : vector<16x16xf32>
    %cst_55 = arith.constant dense<0xFF800000> : vector<16xf32>
    %66 = vector.multi_reduction <maximumf>, %65, %cst_55 [1] : vector<16x16xf32> to vector<16xf32>
    %cst_56 = arith.constant 0xFF800000 : f32
    %67 = vector.broadcast %cst_56 : f32 to vector<16xf32>
    %68 = arith.maximumf %67, %66 : vector<16xf32>
    %69 = vector.shape_cast %68 : vector<16xf32> to vector<16x1xf32>
    %70 = vector.broadcast %69 : vector<16x1xf32> to vector<16x16xf32>
    %71 = arith.subf %65, %70 : vector<16x16xf32>
    %72 = math.exp %71 : vector<16x16xf32>
    %cst_57 = arith.constant dense<0.000000e+00> : vector<16xf32>
    %73 = vector.multi_reduction <add>, %72, %cst_57 [1] : vector<16x16xf32> to vector<16xf32>
    %74 = vector.shape_cast %73 : vector<16xf32> to vector<16x1xf32>
    %75 = vector.broadcast %74 : vector<16x1xf32> to vector<16x16xf32>
    %76 = arith.divf %72, %75 : vector<16x16xf32>
    %cst_58 = arith.constant dense<0.000000e+00> : vector<16x8xf32>
    %77 = tpu.matmul %76, %63, %cst_58 {dimension_numbers = #tpu.dot_dimension_numbers<[1], [0], [0], [1], [0, 0, 1, 1], [], []>} : vector<16x16xf32>, vector<16x8xf32>, vector<16x8xf32> -> vector<16x8xf32>
    %c1_59 = arith.constant 1 : index
    %c0_60 = arith.constant 0 : index
    %c0_61 = arith.constant 0 : index
    %78 = vector.load %arg9[%c1_59, %c0_60, %c0_61] : memref<4x8x32xf32, #tpu.memory_space<vmem>>, vector<1x8x32xf32>
    %79 = vector.shape_cast %78 : vector<1x8x32xf32> to vector<8x32xf32>
    %cst_62 = arith.constant dense<0.000000e+00> : vector<16x32xf32>
    %80 = tpu.matmul %77, %79, %cst_62 {dimension_numbers = #tpu.dot_dimension_numbers<[1], [0], [0], [1], [0, 0, 1, 1], [], []>} : vector<16x8xf32>, vector<8x32xf32>, vector<16x32xf32> -> vector<16x32xf32>
    %81 = arith.addf %42, %80 : vector<16x32xf32>
    %c2 = arith.constant 2 : index
    %c0_63 = arith.constant 0 : index
    %c0_64 = arith.constant 0 : index
    %82 = vector.load %arg3[%c2, %c0_63, %c0_64] : memref<4x32x8xf32, #tpu.memory_space<vmem>>, vector<1x32x8xf32>
    %83 = vector.shape_cast %82 : vector<1x32x8xf32> to vector<32x8xf32>
    %cst_65 = arith.constant dense<0.000000e+00> : vector<16x8xf32>
    %84 = tpu.matmul %0, %83, %cst_65 {dimension_numbers = #tpu.dot_dimension_numbers<[1], [0], [0], [1], [0, 0, 1, 1], [], []>} : vector<16x32xf32>, vector<32x8xf32>, vector<16x8xf32> -> vector<16x8xf32>
    %c2_66 = arith.constant 2 : index
    %c0_67 = arith.constant 0 : index
    %c0_68 = arith.constant 0 : index
    %85 = vector.load %arg6[%c2_66, %c0_67, %c0_68] : memref<4x1x8xf32, #tpu.memory_space<vmem>>, vector<1x1x8xf32>
    %86 = vector.shape_cast %85 : vector<1x1x8xf32> to vector<1x8xf32>
    %87 = vector.broadcast %86 : vector<1x8xf32> to vector<16x8xf32>
    %88 = arith.addf %84, %87 : vector<16x8xf32>
    %c2_69 = arith.constant 2 : index
    %c0_70 = arith.constant 0 : index
    %c0_71 = arith.constant 0 : index
    %89 = vector.load %arg4[%c2_69, %c0_70, %c0_71] : memref<4x32x8xf32, #tpu.memory_space<vmem>>, vector<1x32x8xf32>
    %90 = vector.shape_cast %89 : vector<1x32x8xf32> to vector<32x8xf32>
    %cst_72 = arith.constant dense<0.000000e+00> : vector<16x8xf32>
    %91 = tpu.matmul %0, %90, %cst_72 {dimension_numbers = #tpu.dot_dimension_numbers<[1], [0], [0], [1], [0, 0, 1, 1], [], []>} : vector<16x32xf32>, vector<32x8xf32>, vector<16x8xf32> -> vector<16x8xf32>
    %c2_73 = arith.constant 2 : index
    %c0_74 = arith.constant 0 : index
    %c0_75 = arith.constant 0 : index
    %92 = vector.load %arg7[%c2_73, %c0_74, %c0_75] : memref<4x1x8xf32, #tpu.memory_space<vmem>>, vector<1x1x8xf32>
    %93 = vector.shape_cast %92 : vector<1x1x8xf32> to vector<1x8xf32>
    %94 = vector.broadcast %93 : vector<1x8xf32> to vector<16x8xf32>
    %95 = arith.addf %91, %94 : vector<16x8xf32>
    %c2_76 = arith.constant 2 : index
    %c0_77 = arith.constant 0 : index
    %c0_78 = arith.constant 0 : index
    %96 = vector.load %arg5[%c2_76, %c0_77, %c0_78] : memref<4x32x8xf32, #tpu.memory_space<vmem>>, vector<1x32x8xf32>
    %97 = vector.shape_cast %96 : vector<1x32x8xf32> to vector<32x8xf32>
    %cst_79 = arith.constant dense<0.000000e+00> : vector<16x8xf32>
    %98 = tpu.matmul %0, %97, %cst_79 {dimension_numbers = #tpu.dot_dimension_numbers<[1], [0], [0], [1], [0, 0, 1, 1], [], []>} : vector<16x32xf32>, vector<32x8xf32>, vector<16x8xf32> -> vector<16x8xf32>
    %c2_80 = arith.constant 2 : index
    %c0_81 = arith.constant 0 : index
    %c0_82 = arith.constant 0 : index
    %99 = vector.load %arg8[%c2_80, %c0_81, %c0_82] : memref<4x1x8xf32, #tpu.memory_space<vmem>>, vector<1x1x8xf32>
    %100 = vector.shape_cast %99 : vector<1x1x8xf32> to vector<1x8xf32>
    %101 = vector.broadcast %100 : vector<1x8xf32> to vector<16x8xf32>
    %102 = arith.addf %98, %101 : vector<16x8xf32>
    "tpu.trace_start"() <{level = 10 : i32, message = "td,sd->ts"}> : () -> ()
    %cst_83 = arith.constant dense<0.000000e+00> : vector<16x16xf32>
    %103 = tpu.matmul %88, %95, %cst_83 {dimension_numbers = #tpu.dot_dimension_numbers<[1], [1], [0], [0], [0, 0, 1, 0], [], []>} : vector<16x8xf32>, vector<16x8xf32>, vector<16x16xf32> -> vector<16x16xf32>
    "tpu.trace_stop"() : () -> ()
    %104 = arith.addf %103, %1 : vector<16x16xf32>
    %cst_84 = arith.constant dense<0xFF800000> : vector<16xf32>
    %105 = vector.multi_reduction <maximumf>, %104, %cst_84 [1] : vector<16x16xf32> to vector<16xf32>
    %cst_85 = arith.constant 0xFF800000 : f32
    %106 = vector.broadcast %cst_85 : f32 to vector<16xf32>
    %107 = arith.maximumf %106, %105 : vector<16xf32>
    %108 = vector.shape_cast %107 : vector<16xf32> to vector<16x1xf32>
    %109 = vector.broadcast %108 : vector<16x1xf32> to vector<16x16xf32>
    %110 = arith.subf %104, %109 : vector<16x16xf32>
    %111 = math.exp %110 : vector<16x16xf32>
    %cst_86 = arith.constant dense<0.000000e+00> : vector<16xf32>
    %112 = vector.multi_reduction <add>, %111, %cst_86 [1] : vector<16x16xf32> to vector<16xf32>
    %113 = vector.shape_cast %112 : vector<16xf32> to vector<16x1xf32>
    %114 = vector.broadcast %113 : vector<16x1xf32> to vector<16x16xf32>
    %115 = arith.divf %111, %114 : vector<16x16xf32>
    %cst_87 = arith.constant dense<0.000000e+00> : vector<16x8xf32>
    %116 = tpu.matmul %115, %102, %cst_87 {dimension_numbers = #tpu.dot_dimension_numbers<[1], [0], [0], [1], [0, 0, 1, 1], [], []>} : vector<16x16xf32>, vector<16x8xf32>, vector<16x8xf32> -> vector<16x8xf32>
    %c2_88 = arith.constant 2 : index
    %c0_89 = arith.constant 0 : index
    %c0_90 = arith.constant 0 : index
    %117 = vector.load %arg9[%c2_88, %c0_89, %c0_90] : memref<4x8x32xf32, #tpu.memory_space<vmem>>, vector<1x8x32xf32>
    %118 = vector.shape_cast %117 : vector<1x8x32xf32> to vector<8x32xf32>
    %cst_91 = arith.constant dense<0.000000e+00> : vector<16x32xf32>
    %119 = tpu.matmul %116, %118, %cst_91 {dimension_numbers = #tpu.dot_dimension_numbers<[1], [0], [0], [1], [0, 0, 1, 1], [], []>} : vector<16x8xf32>, vector<8x32xf32>, vector<16x32xf32> -> vector<16x32xf32>
    %120 = arith.addf %81, %119 : vector<16x32xf32>
    %c3 = arith.constant 3 : index
    %c0_92 = arith.constant 0 : index
    %c0_93 = arith.constant 0 : index
    %121 = vector.load %arg3[%c3, %c0_92, %c0_93] : memref<4x32x8xf32, #tpu.memory_space<vmem>>, vector<1x32x8xf32>
    %122 = vector.shape_cast %121 : vector<1x32x8xf32> to vector<32x8xf32>
    %cst_94 = arith.constant dense<0.000000e+00> : vector<16x8xf32>
    %123 = tpu.matmul %0, %122, %cst_94 {dimension_numbers = #tpu.dot_dimension_numbers<[1], [0], [0], [1], [0, 0, 1, 1], [], []>} : vector<16x32xf32>, vector<32x8xf32>, vector<16x8xf32> -> vector<16x8xf32>
    %c3_95 = arith.constant 3 : index
    %c0_96 = arith.constant 0 : index
    %c0_97 = arith.constant 0 : index
    %124 = vector.load %arg6[%c3_95, %c0_96, %c0_97] : memref<4x1x8xf32, #tpu.memory_space<vmem>>, vector<1x1x8xf32>
    %125 = vector.shape_cast %124 : vector<1x1x8xf32> to vector<1x8xf32>
    %126 = vector.broadcast %125 : vector<1x8xf32> to vector<16x8xf32>
    %127 = arith.addf %123, %126 : vector<16x8xf32>
    %c3_98 = arith.constant 3 : index
    %c0_99 = arith.constant 0 : index
    %c0_100 = arith.constant 0 : index
    %128 = vector.load %arg4[%c3_98, %c0_99, %c0_100] : memref<4x32x8xf32, #tpu.memory_space<vmem>>, vector<1x32x8xf32>
    %129 = vector.shape_cast %128 : vector<1x32x8xf32> to vector<32x8xf32>
    %cst_101 = arith.constant dense<0.000000e+00> : vector<16x8xf32>
    %130 = tpu.matmul %0, %129, %cst_101 {dimension_numbers = #tpu.dot_dimension_numbers<[1], [0], [0], [1], [0, 0, 1, 1], [], []>} : vector<16x32xf32>, vector<32x8xf32>, vector<16x8xf32> -> vector<16x8xf32>
    %c3_102 = arith.constant 3 : index
    %c0_103 = arith.constant 0 : index
    %c0_104 = arith.constant 0 : index
    %131 = vector.load %arg7[%c3_102, %c0_103, %c0_104] : memref<4x1x8xf32, #tpu.memory_space<vmem>>, vector<1x1x8xf32>
    %132 = vector.shape_cast %131 : vector<1x1x8xf32> to vector<1x8xf32>
    %133 = vector.broadcast %132 : vector<1x8xf32> to vector<16x8xf32>
    %134 = arith.addf %130, %133 : vector<16x8xf32>
    %c3_105 = arith.constant 3 : index
    %c0_106 = arith.constant 0 : index
    %c0_107 = arith.constant 0 : index
    %135 = vector.load %arg5[%c3_105, %c0_106, %c0_107] : memref<4x32x8xf32, #tpu.memory_space<vmem>>, vector<1x32x8xf32>
    %136 = vector.shape_cast %135 : vector<1x32x8xf32> to vector<32x8xf32>
    %cst_108 = arith.constant dense<0.000000e+00> : vector<16x8xf32>
    %137 = tpu.matmul %0, %136, %cst_108 {dimension_numbers = #tpu.dot_dimension_numbers<[1], [0], [0], [1], [0, 0, 1, 1], [], []>} : vector<16x32xf32>, vector<32x8xf32>, vector<16x8xf32> -> vector<16x8xf32>
    %c3_109 = arith.constant 3 : index
    %c0_110 = arith.constant 0 : index
    %c0_111 = arith.constant 0 : index
    %138 = vector.load %arg8[%c3_109, %c0_110, %c0_111] : memref<4x1x8xf32, #tpu.memory_space<vmem>>, vector<1x1x8xf32>
    %139 = vector.shape_cast %138 : vector<1x1x8xf32> to vector<1x8xf32>
    %140 = vector.broadcast %139 : vector<1x8xf32> to vector<16x8xf32>
    %141 = arith.addf %137, %140 : vector<16x8xf32>
    "tpu.trace_start"() <{level = 10 : i32, message = "td,sd->ts"}> : () -> ()
    %cst_112 = arith.constant dense<0.000000e+00> : vector<16x16xf32>
    %142 = tpu.matmul %127, %134, %cst_112 {dimension_numbers = #tpu.dot_dimension_numbers<[1], [1], [0], [0], [0, 0, 1, 0], [], []>} : vector<16x8xf32>, vector<16x8xf32>, vector<16x16xf32> -> vector<16x16xf32>
    "tpu.trace_stop"() : () -> ()
    %143 = arith.addf %142, %1 : vector<16x16xf32>
    %cst_113 = arith.constant dense<0xFF800000> : vector<16xf32>
    %144 = vector.multi_reduction <maximumf>, %143, %cst_113 [1] : vector<16x16xf32> to vector<16xf32>
    %cst_114 = arith.constant 0xFF800000 : f32
    %145 = vector.broadcast %cst_114 : f32 to vector<16xf32>
    %146 = arith.maximumf %145, %144 : vector<16xf32>
    %147 = vector.shape_cast %146 : vector<16xf32> to vector<16x1xf32>
    %148 = vector.broadcast %147 : vector<16x1xf32> to vector<16x16xf32>
    %149 = arith.subf %143, %148 : vector<16x16xf32>
    %150 = math.exp %149 : vector<16x16xf32>
    %cst_115 = arith.constant dense<0.000000e+00> : vector<16xf32>
    %151 = vector.multi_reduction <add>, %150, %cst_115 [1] : vector<16x16xf32> to vector<16xf32>
    %152 = vector.shape_cast %151 : vector<16xf32> to vector<16x1xf32>
    %153 = vector.broadcast %152 : vector<16x1xf32> to vector<16x16xf32>
    %154 = arith.divf %150, %153 : vector<16x16xf32>
    %cst_116 = arith.constant dense<0.000000e+00> : vector<16x8xf32>
    %155 = tpu.matmul %154, %141, %cst_116 {dimension_numbers = #tpu.dot_dimension_numbers<[1], [0], [0], [1], [0, 0, 1, 1], [], []>} : vector<16x16xf32>, vector<16x8xf32>, vector<16x8xf32> -> vector<16x8xf32>
    %c3_117 = arith.constant 3 : index
    %c0_118 = arith.constant 0 : index
    %c0_119 = arith.constant 0 : index
    %156 = vector.load %arg9[%c3_117, %c0_118, %c0_119] : memref<4x8x32xf32, #tpu.memory_space<vmem>>, vector<1x8x32xf32>
    %157 = vector.shape_cast %156 : vector<1x8x32xf32> to vector<8x32xf32>
    %cst_120 = arith.constant dense<0.000000e+00> : vector<16x32xf32>
    %158 = tpu.matmul %155, %157, %cst_120 {dimension_numbers = #tpu.dot_dimension_numbers<[1], [0], [0], [1], [0, 0, 1, 1], [], []>} : vector<16x8xf32>, vector<8x32xf32>, vector<16x32xf32> -> vector<16x32xf32>
    %159 = arith.addf %120, %158 : vector<16x32xf32>
    %c0_121 = arith.constant 0 : index
    %c0_122 = arith.constant 0 : index
    %160 = vector.load %arg11[%c0_121, %c0_122] : memref<16x32xf32, #tpu.memory_space<vmem>>, vector<16x32xf32>
    tpu.vector_store %arg11[%c0_121, %c0_122], %159 {strides = array<i32>} : memref<16x32xf32, #tpu.memory_space<vmem>>, vector<16x32xf32>,
    return
  }
  func.func @transform_0(%arg0: i32) -> (i32, i32) {
    %c0_i32 = arith.constant 0 : i32
    %c0_i32_0 = arith.constant 0 : i32
    return %arg0, %c0_i32 : i32, i32
  }
  func.func @transform_1(%arg0: i32) -> (i32, i32) {
    %c0_i32 = arith.constant 0 : i32
    %c0_i32_0 = arith.constant 0 : i32
    %c0_i32_1 = arith.constant 0 : i32
    return %c0_i32, %c0_i32_0 : i32, i32
  }
  func.func @transform_2(%arg0: i32) -> (i32, i32, i32) {
    %c0_i32 = arith.constant 0 : i32
    %c0_i32_0 = arith.constant 0 : i32
    %c0_i32_1 = arith.constant 0 : i32
    %c0_i32_2 = arith.constant 0 : i32
    return %c0_i32, %c0_i32_0, %c0_i32_1 : i32, i32, i32
  }
  func.func @transform_3(%arg0: i32) -> (i32, i32, i32) {
    %c0_i32 = arith.constant 0 : i32
    %c0_i32_0 = arith.constant 0 : i32
    %c0_i32_1 = arith.constant 0 : i32
    %c0_i32_2 = arith.constant 0 : i32
    return %c0_i32, %c0_i32_0, %c0_i32_1 : i32, i32, i32
  }
  func.func @transform_4(%arg0: i32) -> (i32, i32, i32) {
    %c0_i32 = arith.constant 0 : i32
    %c0_i32_0 = arith.constant 0 : i32
    %c0_i32_1 = arith.constant 0 : i32
    %c0_i32_2 = arith.constant 0 : i32
    return %c0_i32, %c0_i32_0, %c0_i32_1 : i32, i32, i32
  }
  func.func @transform_5(%arg0: i32) -> (i32, i32, i32) {
    %c0_i32 = arith.constant 0 : i32
    %c0_i32_0 = arith.constant 0 : i32
    %c0_i32_1 = arith.constant 0 : i32
    %c0_i32_2 = arith.constant 0 : i32
    return %c0_i32, %c0_i32_0, %c0_i32_1 : i32, i32, i32
  }
  func.func @transform_6(%arg0: i32) -> (i32, i32, i32) {
    %c0_i32 = arith.constant 0 : i32
    %c0_i32_0 = arith.constant 0 : i32
    %c0_i32_1 = arith.constant 0 : i32
    %c0_i32_2 = arith.constant 0 : i32
    return %c0_i32, %c0_i32_0, %c0_i32_1 : i32, i32, i32
  }
  func.func @transform_7(%arg0: i32) -> (i32, i32, i32) {
    %c0_i32 = arith.constant 0 : i32
    %c0_i32_0 = arith.constant 0 : i32
    %c0_i32_1 = arith.constant 0 : i32
    %c0_i32_2 = arith.constant 0 : i32
    return %c0_i32, %c0_i32_0, %c0_i32_1 : i32, i32, i32
  }
  func.func @transform_8(%arg0: i32) -> (i32, i32, i32) {
    %c0_i32 = arith.constant 0 : i32
    %c0_i32_0 = arith.constant 0 : i32
    %c0_i32_1 = arith.constant 0 : i32
    %c0_i32_2 = arith.constant 0 : i32
    return %c0_i32, %c0_i32_0, %c0_i32_1 : i32, i32, i32
  }
  func.func @transform_9(%arg0: i32) -> (i32, i32) {
    %c0_i32 = arith.constant 0 : i32
    %c0_i32_0 = arith.constant 0 : i32
    %c0_i32_1 = arith.constant 0 : i32
    return %c0_i32, %c0_i32_0 : i32, i32
  }
  func.func @transform_10(%arg0: i32) -> (i32, i32) {
    %c0_i32 = arith.constant 0 : i32
    %c0_i32_0 = arith.constant 0 : i32
    return %arg0, %c0_i32 : i32, i32
  }
}

</mosaic_0001>

<llo_original>
// kernel: tpu_custom_call.1
$region0: #{tpu_custom_call.1}
  #allocation0 [shape = 'u32[]', space=smem, size = 0x4, offset = 0x4, fixed_abs, tag = 'smem constant byte address 0x4 - core index']
  #allocation1 [shape = 'u32[72,128]{1,0:T(1,128)}', space=vmem, size = 0x9000, scoped, tag = 'internal scratch']
  %s0 = inlined_call_operand.vmem [shape: f32[16,32], index: 0, kind: input, shape index: {}]
  %s1 = inlined_call_operand.vmem [shape: f32[16,16], index: 1, kind: input, shape index: {}]
  %s2 = inlined_call_operand.vmem [shape: f32[4,32,8], index: 2, kind: input, shape index: {}]
  %s3 = inlined_call_operand.vmem [shape: f32[4,32,8], index: 3, kind: input, shape index: {}]
  %s4 = inlined_call_operand.vmem [shape: f32[4,32,8], index: 4, kind: input, shape index: {}]
  %s5 = inlined_call_operand.vmem [shape: f32[4,1,8], index: 5, kind: input, shape index: {}]
  %s6 = inlined_call_operand.vmem [shape: f32[4,1,8], index: 6, kind: input, shape index: {}]
  %s7 = inlined_call_operand.vmem [shape: f32[4,1,8], index: 7, kind: input, shape index: {}]
  %s8 = inlined_call_operand.vmem [shape: f32[4,8,32], index: 8, kind: input, shape index: {}]
  %s9 = inlined_call_operand.vmem [shape: f32[1,32], index: 9, kind: input, shape index: {}]
  %s10 = inlined_call_operand.hbm [shape: f32[16,32], index: 10, kind: output, shape index: {}]
  %s11 = sld [smem:[#allocation0]]
  $region50: #{tpu_custom_call.1} parent=0
    _
  %s13 = ssub.s32 1, %s11
  %s14 = scalar_select 0, %s13, %s11
  $region1: #{tpu_custom_call.1} parent=0
    #allocation2 [shape = 'u8[8192]{0}', space=vmem, size = 0x2000, scoped, tag = 'output window, operand 0, single buffered']
    #allocation3 [shape = 's32[1]{0}', space=sflag, size = 0x4, scoped, tag = 'scoped memory for tpu_custom_call.1']
    %15 = vsyncpa [#allocation3], 0
    // Predicated region
    $region2: #{tpu_custom_call.1} parent=1 // pred_check
      _
    $region3: #{tpu_custom_call.1} parent=1 // pred_check_branch
      %17 = sbr.rel (0) target = $region5
    $region4: #{tpu_custom_call.1} parent=1 // pred_region
      _
    $region5: #{tpu_custom_call.1} parent=1 // pred_fallthru
      _
    // Predicated region
    $region6: #{tpu_custom_call.1} parent=1 // pred_check
      _
    $region7: #{tpu_custom_call.1} parent=1 // pred_check_branch
      %19 = sbr.rel (0) target = $region9
    $region8: #{tpu_custom_call.1} parent=1 // pred_region
      _
    $region9: #{tpu_custom_call.1} parent=1 // pred_fallthru
      _
    // Predicated region
    $region10: #{tpu_custom_call.1} parent=1 // pred_check
      _
    $region11: #{tpu_custom_call.1} parent=1 // pred_check_branch
      %21 = sbr.rel (0) target = $region13
    $region12: #{tpu_custom_call.1} parent=1 // pred_region
      _
    $region13: #{tpu_custom_call.1} parent=1 // pred_fallthru
      _
    // Predicated region
    $region14: #{tpu_custom_call.1} parent=1 // pred_check
      _
    $region15: #{tpu_custom_call.1} parent=1 // pred_check_branch
      %23 = sbr.rel (0) target = $region17
    $region16: #{tpu_custom_call.1} parent=1 // pred_region
      _
    $region17: #{tpu_custom_call.1} parent=1 // pred_fallthru
      _
    // Predicated region
    $region18: #{tpu_custom_call.1} parent=1 // pred_check
      _
    $region19: #{tpu_custom_call.1} parent=1 // pred_check_branch
      %25 = sbr.rel (0) target = $region21
    $region20: #{tpu_custom_call.1} parent=1 // pred_region
      _
    $region21: #{tpu_custom_call.1} parent=1 // pred_fallthru
      _
    // Predicated region
    $region22: #{tpu_custom_call.1} parent=1 // pred_check
      _
    $region23: #{tpu_custom_call.1} parent=1 // pred_check_branch
      %27 = sbr.rel (0) target = $region25
    $region24: #{tpu_custom_call.1} parent=1 // pred_region
      _
    $region25: #{tpu_custom_call.1} parent=1 // pred_fallthru
      _
    // Predicated region
    $region26: #{tpu_custom_call.1} parent=1 // pred_check
      _
    $region27: #{tpu_custom_call.1} parent=1 // pred_check_branch
      %29 = sbr.rel (0) target = $region29
    $region28: #{tpu_custom_call.1} parent=1 // pred_region
      _
    $region29: #{tpu_custom_call.1} parent=1 // pred_fallthru
      _
    // Predicated region
    $region30: #{tpu_custom_call.1} parent=1 // pred_check
      _
    $region31: #{tpu_custom_call.1} parent=1 // pred_check_branch
      %31 = sbr.rel (0) target = $region33
    $region32: #{tpu_custom_call.1} parent=1 // pred_region
      _
    $region33: #{tpu_custom_call.1} parent=1 // pred_fallthru
      _
    // Predicated region
    $region34: #{tpu_custom_call.1} parent=1 // pred_check
      _
    $region35: #{tpu_custom_call.1} parent=1 // pred_check_branch
      %33 = sbr.rel (0) target = $region37
    $region36: #{tpu_custom_call.1} parent=1 // pred_region
      _
    $region37: #{tpu_custom_call.1} parent=1 // pred_fallthru
      _
    // Predicated region
    $region38: #{tpu_custom_call.1} parent=1 // pred_check
      _
    $region39: #{tpu_custom_call.1} parent=1 // pred_check_branch
      %35 = sbr.rel (0) target = $region41
    $region40: #{tpu_custom_call.1} parent=1 // pred_region
      _
    $region41: #{tpu_custom_call.1} parent=1 // pred_fallthru
      _
    %v36 = vld [vmem:[%s0] sm:$0xff]
    %v37 = vld [vmem:[%s0 + $0x8] sm:$0xff]
    %v38 = vld [vmem:[%s1] sm:$0xff]
    %v39 = vld [vmem:[%s1 + $0x8] sm:$0xff]
    %v40 = vld [vmem:[%s9] sm:$0x1]
    %v41 = vld [vmem:[%s2] sm:$0xff]
    %v42 = vld [vmem:[%s2 + $0x8] sm:$0xff]
    %v43 = vld [vmem:[%s2 + $0x10] sm:$0xff]
    %v44 = vld [vmem:[%s2 + $0x18] sm:$0xff]
    %v45 = vld [vmem:[%s5] sm:$0x1]
    %v47 = vperm.slane %v45, 0
    %vm49 = vcmask 261120
    %v51 = vsel %vm49, %v36, 0
    %v54 = vsel %vm49, %v37, 0
    %56 = vmatpush.msra.mxu0 0.0
    %57 = vmatpush.msra.mxu0 0.0
    %58 = vmatpush.msra.mxu0 0.0
    %59 = vmatpush.msra.mxu0 0.0
    %60 = vmatpush.msra.mxu0 0.0
    %61 = vmatpush.msra.mxu0 0.0
    %62 = vmatpush.msra.mxu0 0.0
    %63 = vmatpush.msra.mxu0 0.0
    %64 = vmatpush.msra.mxu0 0.0
    %65 = vmatpush.msra.mxu0 0.0
    %66 = vmatpush.msra.mxu0 0.0
    %67 = vmatpush.msra.mxu0 0.0
    %68 = vmatpush.msra.mxu0 %v44
    %69 = vmatpush.msra.mxu0 %v43
    %70 = vmatpush.msra.mxu0 %v42
    %71 = vmatpush.msra.mxu0 %v41
    %72 = vmatmul.f32.gmra.mxu0 %v51
    %v73 = vpop.f32.mrf.mxu0
    %v74 = vadd.f32 %v47, %v73
    %75 = vmatmul.f32.gmra.mxu0 %v54
    %v76 = vpop.f32.mrf.mxu0
    %v77 = vadd.f32 %v47, %v76
    %78 = vdwg.mxu0
    %v79 = vld [vmem:[%s3] sm:$0xff]
    %v80 = vld [vmem:[%s3 + $0x8] sm:$0xff]
    %v81 = vld [vmem:[%s3 + $0x10] sm:$0xff]
    %v82 = vld [vmem:[%s3 + $0x18] sm:$0xff]
    %v83 = vld [vmem:[%s6] sm:$0x1]
    %v85 = vperm.slane %v83, 0
    %87 = vmatpush.msra.mxu0 0.0
    %88 = vmatpush.msra.mxu0 0.0
    %89 = vmatpush.msra.mxu0 0.0
    %90 = vmatpush.msra.mxu0 0.0
    %91 = vmatpush.msra.mxu0 0.0
    %92 = vmatpush.msra.mxu0 0.0
    %93 = vmatpush.msra.mxu0 0.0
    %94 = vmatpush.msra.mxu0 0.0
    %95 = vmatpush.msra.mxu0 0.0
    %96 = vmatpush.msra.mxu0 0.0
    %97 = vmatpush.msra.mxu0 0.0
    %98 = vmatpush.msra.mxu0 0.0
    %99 = vmatpush.msra.mxu0 %v82
    %100 = vmatpush.msra.mxu0 %v81
    %101 = vmatpush.msra.mxu0 %v80
    %102 = vmatpush.msra.mxu0 %v79
    %103 = vmatmul.f32.gmra.mxu0 %v51
    %v104 = vpop.f32.mrf.mxu0
    %v105 = vadd.f32 %v85, %v104
    %106 = vmatmul.f32.gmra.mxu0 %v54
    %v107 = vpop.f32.mrf.mxu0
    %v108 = vadd.f32 %v85, %v107
    %109 = vdwg.mxu0
    %v110 = vld [vmem:[%s4] sm:$0xff]
    %v111 = vld [vmem:[%s4 + $0x8] sm:$0xff]
    %v112 = vld [vmem:[%s4 + $0x10] sm:$0xff]
    %v113 = vld [vmem:[%s4 + $0x18] sm:$0xff]
    %v114 = vld [vmem:[%s7] sm:$0x1]
    %v116 = vperm.slane %v114, 0
    %118 = vmatpush.msra.mxu0 0.0
    %119 = vmatpush.msra.mxu0 0.0
    %120 = vmatpush.msra.mxu0 0.0
    %121 = vmatpush.msra.mxu0 0.0
    %122 = vmatpush.msra.mxu0 0.0
    %123 = vmatpush.msra.mxu0 0.0
    %124 = vmatpush.msra.mxu0 0.0
    %125 = vmatpush.msra.mxu0 0.0
    %126 = vmatpush.msra.mxu0 0.0
    %127 = vmatpush.msra.mxu0 0.0
    %128 = vmatpush.msra.mxu0 0.0
    %129 = vmatpush.msra.mxu0 0.0
    %130 = vmatpush.msra.mxu0 %v113
    %131 = vmatpush.msra.mxu0 %v112
    %132 = vmatpush.msra.mxu0 %v111
    %133 = vmatpush.msra.mxu0 %v110
    %134 = vmatmul.f32.gmra.mxu0 %v51
    %v135 = vpop.f32.mrf.mxu0
    %v136 = vadd.f32 %v116, %v135
    %137 = vmatmul.f32.gmra.mxu0 %v54
    %v138 = vpop.f32.mrf.mxu0
    %v139 = vadd.f32 %v116, %v138
    %140 = vdwg.mxu0
    %vm141 = vcmask 64512
    %v143 = vsel %vm141, %v74, 0
    %v146 = vsel %vm141, %v77, 0
    %v149 = vsel %vm141, %v105, 0
    %v152 = vsel %vm141, %v108, 0
    %154 = vmatpush.xpose.msra.mxu0 0.0
    %155 = vmatpush.xpose.msra.mxu0 0.0
    %156 = vmatpush.xpose.msra.mxu0 0.0
    %157 = vmatpush.xpose.msra.mxu0 0.0
    %158 = vmatpush.xpose.msra.mxu0 0.0
    %159 = vmatpush.xpose.msra.mxu0 0.0
    %160 = vmatpush.xpose.msra.mxu0 0.0
    %161 = vmatpush.xpose.msra.mxu0 0.0
    %162 = vmatpush.xpose.msra.mxu0 0.0
    %163 = vmatpush.xpose.msra.mxu0 0.0
    %164 = vmatpush.xpose.msra.mxu0 0.0
    %165 = vmatpush.xpose.msra.mxu0 0.0
    %166 = vmatpush.xpose.msra.mxu0 0.0
    %167 = vmatpush.xpose.msra.mxu0 0.0
    %168 = vmatpush.xpose.msra.mxu0 %v152
    %169 = vmatpush.xpose.msra.mxu0 %v149
    %170 = vmatmul.f32.gmra.mxu0 %v143
    %v171 = vpop.f32.mrf.mxu0
    %v172 = vadd.f32 %v38, %v171
    %173 = vmatmul.f32.gmra.mxu0 %v146
    %v174 = vpop.f32.mrf.mxu0
    %v175 = vadd.f32 %v39, %v174
    %176 = vdwg.mxu0
    %vm177 = vcmask 130048
    %v178 = vsel %vm177, %v172, -inf
    %179 = vmax.xlane.f32.xlu0 %v178
    %v180 = vpop.xlane.xlu0 %179
    %v181 = vsel %vm177, %v175, -inf
    %182 = vmax.xlane.f32.xlu0 %v181
    %v183 = vpop.xlane.xlu0 %182
    %v184 = vsub.f32 %v172, %v180
    %v185 = vsub.f32 %v175, %v183
    %v186 = vmul.f32 %v184, 1.442695
    %v187 = vpow.pop %v186
    %v188 = vmul.f32 %v185, 1.442695
    %v189 = vpow.pop %v188
    %v190 = vsel %vm177, %v187, 0.0
    %191 = vadd.xlane.f32.xlu0 %v190
    %v192 = vpop.xlane.xlu0 %191
    %v193 = vsel %vm177, %v189, 0.0
    %194 = vadd.xlane.f32.xlu0 %v193
    %v195 = vpop.xlane.xlu0 %194
    %v196 = vrcp.pop %v192
    %v197 = vmul.f32 %v192, %v196
    %v198 = vsub.f32 1.0, %v197
    %v199 = vmul.f32 %v196, %v198
    %v200 = vadd.f32 %v196, %v199
    %vm201 = vweird.f32 %v192
    %vm202 = vweird.f32 %v196
    %vm203 = vmor %vm201, %vm202
    %v204 = vsel %vm203, %v196, %v200
    %v205 = vand.u32 2147483647, %v192
    %vm206 = vcmp.eq.f32.partialorder %v205, 8.507059e+37
    %v207 = vand.u32 %v192, 2147483648
    %v208 = vor.u32 1.1754944e-38, %v207
    %v209 = vsel %vm206, %v208, %v204
    %v210 = vmul.f32 %v187, %v209
    %v211 = vrcp.pop %v195
    %v212 = vmul.f32 %v195, %v211
    %v213 = vsub.f32 1.0, %v212
    %v214 = vmul.f32 %v211, %v213
    %v215 = vadd.f32 %v211, %v214
    %vm216 = vweird.f32 %v195
    %vm217 = vweird.f32 %v211
    %vm218 = vmor %vm216, %vm217
    %v219 = vsel %vm218, %v211, %v215
    %v220 = vand.u32 2147483647, %v195
    %vm221 = vcmp.eq.f32.partialorder %v220, 8.507059e+37
    %v222 = vand.u32 %v195, 2147483648
    %v223 = vor.u32 1.1754944e-38, %v222
    %v224 = vsel %vm221, %v223, %v219
    %v225 = vmul.f32 %v189, %v224
    %v227 = vsel %vm177, %v210, 0
    %v230 = vsel %vm177, %v225, 0
    %232 = vmatpush.msra.mxu0 0.0
    %233 = vmatpush.msra.mxu0 0.0
    %234 = vmatpush.msra.mxu0 0.0
    %235 = vmatpush.msra.mxu0 0.0
    %236 = vmatpush.msra.mxu0 0.0
    %237 = vmatpush.msra.mxu0 0.0
    %238 = vmatpush.msra.mxu0 0.0
    %239 = vmatpush.msra.mxu0 0.0
    %240 = vmatpush.msra.mxu0 0.0
    %241 = vmatpush.msra.mxu0 0.0
    %242 = vmatpush.msra.mxu0 0.0
    %243 = vmatpush.msra.mxu0 0.0
    %244 = vmatpush.msra.mxu0 0.0
    %245 = vmatpush.msra.mxu0 0.0
    %246 = vmatpush.msra.mxu0 %v139
    %247 = vmatpush.msra.mxu0 %v136
    %248 = vmatmul.f32.gmra.mxu0 %v227
    %v249 = vpop.f32.mrf.mxu0
    %v250 = vadd.f32 0.0, %v249
    %251 = vmatmul.f32.gmra.mxu0 %v230
    %v252 = vpop.f32.mrf.mxu0
    %v253 = vadd.f32 0.0, %v252
    %254 = vdwg.mxu0
    %v255 = vld [vmem:[%s8] sm:$0xff]
    %v257 = vsel %vm141, %v250, 0
    %v260 = vsel %vm141, %v253, 0
    %262 = vmatpush.msra.mxu0 0.0
    %263 = vmatpush.msra.mxu0 0.0
    %264 = vmatpush.msra.mxu0 0.0
    %265 = vmatpush.msra.mxu0 0.0
    %266 = vmatpush.msra.mxu0 0.0
    %267 = vmatpush.msra.mxu0 0.0
    %268 = vmatpush.msra.mxu0 0.0
    %269 = vmatpush.msra.mxu0 0.0
    %270 = vmatpush.msra.mxu0 0.0
    %271 = vmatpush.msra.mxu0 0.0
    %272 = vmatpush.msra.mxu0 0.0
    %273 = vmatpush.msra.mxu0 0.0
    %274 = vmatpush.msra.mxu0 0.0
    %275 = vmatpush.msra.mxu0 0.0
    %276 = vmatpush.msra.mxu0 0.0
    %277 = vmatpush.msra.mxu0 %v255
    %278 = vmatmul.f32.gmra.mxu0 %v257
    %v279 = vpop.f32.mrf.mxu0
    %v280 = vadd.f32 0.0, %v279
    %281 = vmatmul.f32.gmra.mxu0 %v260
    %v282 = vpop.f32.mrf.mxu0
    %v283 = vadd.f32 0.0, %v282
    %284 = vdwg.mxu0
    %v286 = vperm.slane %v40, 0
    %v288 = vadd.f32 %v286, %v280
    %v289 = vadd.f32 %v286, %v283
    %s290 = scalar_lea.vmem %s2, 32
    %v291 = vld [vmem:[%s290] sm:$0xff]
    %v292 = vld [vmem:[%s290 + $0x8] sm:$0xff]
    %v293 = vld [vmem:[%s290 + $0x10] sm:$0xff]
    %v294 = vld [vmem:[%s290 + $0x18] sm:$0xff]
    %s295 = scalar_lea.vmem %s5, 1
    %v296 = vld [vmem:[%s295] sm:$0x1]
    %v298 = vperm.slane %v296, 0
    %300 = vmatpush.msra.mxu0 0.0
    %301 = vmatpush.msra.mxu0 0.0
    %302 = vmatpush.msra.mxu0 0.0
    %303 = vmatpush.msra.mxu0 0.0
    %304 = vmatpush.msra.mxu0 0.0
    %305 = vmatpush.msra.mxu0 0.0
    %306 = vmatpush.msra.mxu0 0.0
    %307 = vmatpush.msra.mxu0 0.0
    %308 = vmatpush.msra.mxu0 0.0
    %309 = vmatpush.msra.mxu0 0.0
    %310 = vmatpush.msra.mxu0 0.0
    %311 = vmatpush.msra.mxu0 0.0
    %312 = vmatpush.msra.mxu0 %v294
    %313 = vmatpush.msra.mxu0 %v293
    %314 = vmatpush.msra.mxu0 %v292
    %315 = vmatpush.msra.mxu0 %v291
    %316 = vmatmul.f32.gmra.mxu0 %v51
    %v317 = vpop.f32.mrf.mxu0
    %v318 = vadd.f32 %v298, %v317
    %319 = vmatmul.f32.gmra.mxu0 %v54
    %v320 = vpop.f32.mrf.mxu0
    %v321 = vadd.f32 %v298, %v320
    %322 = vdwg.mxu0
    %s323 = scalar_lea.vmem %s3, 32
    %v324 = vld [vmem:[%s323] sm:$0xff]
    %v325 = vld [vmem:[%s323 + $0x8] sm:$0xff]
    %v326 = vld [vmem:[%s323 + $0x10] sm:$0xff]
    %v327 = vld [vmem:[%s323 + $0x18] sm:$0xff]
    %s328 = scalar_lea.vmem %s6, 1
    %v329 = vld [vmem:[%s328] sm:$0x1]
    %v331 = vperm.slane %v329, 0
    %333 = vmatpush.msra.mxu0 0.0
    %334 = vmatpush.msra.mxu0 0.0
    %335 = vmatpush.msra.mxu0 0.0
    %336 = vmatpush.msra.mxu0 0.0
    %337 = vmatpush.msra.mxu0 0.0
    %338 = vmatpush.msra.mxu0 0.0
    %339 = vmatpush.msra.mxu0 0.0
    %340 = vmatpush.msra.mxu0 0.0
    %341 = vmatpush.msra.mxu0 0.0
    %342 = vmatpush.msra.mxu0 0.0
    %343 = vmatpush.msra.mxu0 0.0
    %344 = vmatpush.msra.mxu0 0.0
    %345 = vmatpush.msra.mxu0 %v327
    %346 = vmatpush.msra.mxu0 %v326
    %347 = vmatpush.msra.mxu0 %v325
    %348 = vmatpush.msra.mxu0 %v324
    %349 = vmatmul.f32.gmra.mxu0 %v51
    %v350 = vpop.f32.mrf.mxu0
    %v351 = vadd.f32 %v331, %v350
    %352 = vmatmul.f32.gmra.mxu0 %v54
    %v353 = vpop.f32.mrf.mxu0
    %v354 = vadd.f32 %v331, %v353
    %355 = vdwg.mxu0
    %s356 = scalar_lea.vmem %s4, 32
    %v357 = vld [vmem:[%s356] sm:$0xff]
    %v358 = vld [vmem:[%s356 + $0x8] sm:$0xff]
    %v359 = vld [vmem:[%s356 + $0x10] sm:$0xff]
    %v360 = vld [vmem:[%s356 + $0x18] sm:$0xff]
    %s361 = scalar_lea.vmem %s7, 1
    %v362 = vld [vmem:[%s361] sm:$0x1]
    %v364 = vperm.slane %v362, 0
    %366 = vmatpush.msra.mxu0 0.0
    %367 = vmatpush.msra.mxu0 0.0
    %368 = vmatpush.msra.mxu0 0.0
    %369 = vmatpush.msra.mxu0 0.0
    %370 = vmatpush.msra.mxu0 0.0
    %371 = vmatpush.msra.mxu0 0.0
    %372 = vmatpush.msra.mxu0 0.0
    %373 = vmatpush.msra.mxu0 0.0
    %374 = vmatpush.msra.mxu0 0.0
    %375 = vmatpush.msra.mxu0 0.0
    %376 = vmatpush.msra.mxu0 0.0
    %377 = vmatpush.msra.mxu0 0.0
    %378 = vmatpush.msra.mxu0 %v360
    %379 = vmatpush.msra.mxu0 %v359
    %380 = vmatpush.msra.mxu0 %v358
    %381 = vmatpush.msra.mxu0 %v357
    %382 = vmatmul.f32.gmra.mxu0 %v51
    %v383 = vpop.f32.mrf.mxu0
    %v384 = vadd.f32 %v364, %v383
    %385 = vmatmul.f32.gmra.mxu0 %v54
    %v386 = vpop.f32.mrf.mxu0
    %v387 = vadd.f32 %v364, %v386
    %388 = vdwg.mxu0
    %v390 = vsel %vm141, %v318, 0
    %v393 = vsel %vm141, %v321, 0
    %v396 = vsel %vm141, %v351, 0
    %v399 = vsel %vm141, %v354, 0
    %401 = vmatpush.xpose.msra.mxu0 0.0
    %402 = vmatpush.xpose.msra.mxu0 0.0
    %403 = vmatpush.xpose.msra.mxu0 0.0
    %404 = vmatpush.xpose.msra.mxu0 0.0
    %405 = vmatpush.xpose.msra.mxu0 0.0
    %406 = vmatpush.xpose.msra.mxu0 0.0
    %407 = vmatpush.xpose.msra.mxu0 0.0
    %408 = vmatpush.xpose.msra.mxu0 0.0
    %409 = vmatpush.xpose.msra.mxu0 0.0
    %410 = vmatpush.xpose.msra.mxu0 0.0
    %411 = vmatpush.xpose.msra.mxu0 0.0
    %412 = vmatpush.xpose.msra.mxu0 0.0
    %413 = vmatpush.xpose.msra.mxu0 0.0
    %414 = vmatpush.xpose.msra.mxu0 0.0
    %415 = vmatpush.xpose.msra.mxu0 %v399
    %416 = vmatpush.xpose.msra.mxu0 %v396
    %417 = vmatmul.f32.gmra.mxu0 %v390
    %v418 = vpop.f32.mrf.mxu0
    %v419 = vadd.f32 %v38, %v418
    %420 = vmatmul.f32.gmra.mxu0 %v393
    %v421 = vpop.f32.mrf.mxu0
    %v422 = vadd.f32 %v39, %v421
    %423 = vdwg.mxu0
    %v424 = vsel %vm177, %v419, -inf
    %425 = vmax.xlane.f32.xlu0 %v424
    %v426 = vpop.xlane.xlu0 %425
    %v427 = vsel %vm177, %v422, -inf
    %428 = vmax.xlane.f32.xlu0 %v427
    %v429 = vpop.xlane.xlu0 %428
    %v430 = vsub.f32 %v419, %v426
    %v431 = vsub.f32 %v422, %v429
    %v432 = vmul.f32 %v430, 1.442695
    %v433 = vpow.pop %v432
    %v434 = vmul.f32 %v431, 1.442695
    %v435 = vpow.pop %v434
    %v436 = vsel %vm177, %v433, 0.0
    %437 = vadd.xlane.f32.xlu0 %v436
    %v438 = vpop.xlane.xlu0 %437
    %v439 = vsel %vm177, %v435, 0.0
    %440 = vadd.xlane.f32.xlu0 %v439
    %v441 = vpop.xlane.xlu0 %440
    %v442 = vrcp.pop %v438
    %v443 = vmul.f32 %v438, %v442
    %v444 = vsub.f32 1.0, %v443
    %v445 = vmul.f32 %v442, %v444
    %v446 = vadd.f32 %v442, %v445
    %vm447 = vweird.f32 %v438
    %vm448 = vweird.f32 %v442
    %vm449 = vmor %vm447, %vm448
    %v450 = vsel %vm449, %v442, %v446
    %v451 = vand.u32 2147483647, %v438
    %vm452 = vcmp.eq.f32.partialorder %v451, 8.507059e+37
    %v453 = vand.u32 %v438, 2147483648
    %v454 = vor.u32 1.1754944e-38, %v453
    %v455 = vsel %vm452, %v454, %v450
    %v456 = vmul.f32 %v433, %v455
    %v457 = vrcp.pop %v441
    %v458 = vmul.f32 %v441, %v457
    %v459 = vsub.f32 1.0, %v458
    %v460 = vmul.f32 %v457, %v459
    %v461 = vadd.f32 %v457, %v460
    %vm462 = vweird.f32 %v441
    %vm463 = vweird.f32 %v457
    %vm464 = vmor %vm462, %vm463
    %v465 = vsel %vm464, %v457, %v461
    %v466 = vand.u32 2147483647, %v441
    %vm467 = vcmp.eq.f32.partialorder %v466, 8.507059e+37
    %v468 = vand.u32 %v441, 2147483648
    %v469 = vor.u32 1.1754944e-38, %v468
    %v470 = vsel %vm467, %v469, %v465
    %v471 = vmul.f32 %v435, %v470
    %v473 = vsel %vm177, %v456, 0
    %v476 = vsel %vm177, %v471, 0
    %478 = vmatpush.msra.mxu0 0.0
    %479 = vmatpush.msra.mxu0 0.0
    %480 = vmatpush.msra.mxu0 0.0
    %481 = vmatpush.msra.mxu0 0.0
    %482 = vmatpush.msra.mxu0 0.0
    %483 = vmatpush.msra.mxu0 0.0
    %484 = vmatpush.msra.mxu0 0.0
    %485 = vmatpush.msra.mxu0 0.0
    %486 = vmatpush.msra.mxu0 0.0
    %487 = vmatpush.msra.mxu0 0.0
    %488 = vmatpush.msra.mxu0 0.0
    %489 = vmatpush.msra.mxu0 0.0
    %490 = vmatpush.msra.mxu0 0.0
    %491 = vmatpush.msra.mxu0 0.0
    %492 = vmatpush.msra.mxu0 %v387
    %493 = vmatpush.msra.mxu0 %v384
    %494 = vmatmul.f32.gmra.mxu0 %v473
    %v495 = vpop.f32.mrf.mxu0
    %v496 = vadd.f32 0.0, %v495
    %497 = vmatmul.f32.gmra.mxu0 %v476
    %v498 = vpop.f32.mrf.mxu0
    %v499 = vadd.f32 0.0, %v498
    %500 = vdwg.mxu0
    %s501 = scalar_lea.vmem %s8, 8
    %v502 = vld [vmem:[%s501] sm:$0xff]
    %v504 = vsel %vm141, %v496, 0
    %v507 = vsel %vm141, %v499, 0
    %509 = vmatpush.msra.mxu0 0.0
    %510 = vmatpush.msra.mxu0 0.0
    %511 = vmatpush.msra.mxu0 0.0
    %512 = vmatpush.msra.mxu0 0.0
    %513 = vmatpush.msra.mxu0 0.0
    %514 = vmatpush.msra.mxu0 0.0
    %515 = vmatpush.msra.mxu0 0.0
    %516 = vmatpush.msra.mxu0 0.0
    %517 = vmatpush.msra.mxu0 0.0
    %518 = vmatpush.msra.mxu0 0.0
    %519 = vmatpush.msra.mxu0 0.0
    %520 = vmatpush.msra.mxu0 0.0
    %521 = vmatpush.msra.mxu0 0.0
    %522 = vmatpush.msra.mxu0 0.0
    %523 = vmatpush.msra.mxu0 0.0
    %524 = vmatpush.msra.mxu0 %v502
    %525 = vmatmul.f32.gmra.mxu0 %v504
    %v526 = vpop.f32.mrf.mxu0
    %v527 = vadd.f32 0.0, %v526
    %528 = vmatmul.f32.gmra.mxu0 %v507
    %v529 = vpop.f32.mrf.mxu0
    %v530 = vadd.f32 0.0, %v529
    %531 = vdwg.mxu0
    %v532 = vadd.f32 %v288, %v527
    %v533 = vadd.f32 %v289, %v530
    %s534 = scalar_lea.vmem %s2, 64
    %v535 = vld [vmem:[%s534] sm:$0xff]
    %v536 = vld [vmem:[%s534 + $0x8] sm:$0xff]
    %v537 = vld [vmem:[%s534 + $0x10] sm:$0xff]
    %v538 = vld [vmem:[%s534 + $0x18] sm:$0xff]
    %s539 = scalar_lea.vmem %s5, 2
    %v540 = vld [vmem:[%s539] sm:$0x1]
    %v542 = vperm.slane %v540, 0
    %544 = vmatpush.msra.mxu0 0.0
    %545 = vmatpush.msra.mxu0 0.0
    %546 = vmatpush.msra.mxu0 0.0
    %547 = vmatpush.msra.mxu0 0.0
    %548 = vmatpush.msra.mxu0 0.0
    %549 = vmatpush.msra.mxu0 0.0
    %550 = vmatpush.msra.mxu0 0.0
    %551 = vmatpush.msra.mxu0 0.0
    %552 = vmatpush.msra.mxu0 0.0
    %553 = vmatpush.msra.mxu0 0.0
    %554 = vmatpush.msra.mxu0 0.0
    %555 = vmatpush.msra.mxu0 0.0
    %556 = vmatpush.msra.mxu0 %v538
    %557 = vmatpush.msra.mxu0 %v537
    %558 = vmatpush.msra.mxu0 %v536
    %559 = vmatpush.msra.mxu0 %v535
    %560 = vmatmul.f32.gmra.mxu0 %v51
    %v561 = vpop.f32.mrf.mxu0
    %v562 = vadd.f32 %v542, %v561
    %563 = vmatmul.f32.gmra.mxu0 %v54
    %v564 = vpop.f32.mrf.mxu0
    %v565 = vadd.f32 %v542, %v564
    %566 = vdwg.mxu0
    %s567 = scalar_lea.vmem %s3, 64
    %v568 = vld [vmem:[%s567] sm:$0xff]
    %v569 = vld [vmem:[%s567 + $0x8] sm:$0xff]
    %v570 = vld [vmem:[%s567 + $0x10] sm:$0xff]
    %v571 = vld [vmem:[%s567 + $0x18] sm:$0xff]
    %s572 = scalar_lea.vmem %s6, 2
    %v573 = vld [vmem:[%s572] sm:$0x1]
    %v575 = vperm.slane %v573, 0
    %577 = vmatpush.msra.mxu0 0.0
    %578 = vmatpush.msra.mxu0 0.0
    %579 = vmatpush.msra.mxu0 0.0
    %580 = vmatpush.msra.mxu0 0.0
    %581 = vmatpush.msra.mxu0 0.0
    %582 = vmatpush.msra.mxu0 0.0
    %583 = vmatpush.msra.mxu0 0.0
    %584 = vmatpush.msra.mxu0 0.0
    %585 = vmatpush.msra.mxu0 0.0
    %586 = vmatpush.msra.mxu0 0.0
    %587 = vmatpush.msra.mxu0 0.0
    %588 = vmatpush.msra.mxu0 0.0
    %589 = vmatpush.msra.mxu0 %v571
    %590 = vmatpush.msra.mxu0 %v570
    %591 = vmatpush.msra.mxu0 %v569
    %592 = vmatpush.msra.mxu0 %v568
    %593 = vmatmul.f32.gmra.mxu0 %v51
    %v594 = vpop.f32.mrf.mxu0
    %v595 = vadd.f32 %v575, %v594
    %596 = vmatmul.f32.gmra.mxu0 %v54
    %v597 = vpop.f32.mrf.mxu0
    %v598 = vadd.f32 %v575, %v597
    %599 = vdwg.mxu0
    %s600 = scalar_lea.vmem %s4, 64
    %v601 = vld [vmem:[%s600] sm:$0xff]
    %v602 = vld [vmem:[%s600 + $0x8] sm:$0xff]
    %v603 = vld [vmem:[%s600 + $0x10] sm:$0xff]
    %v604 = vld [vmem:[%s600 + $0x18] sm:$0xff]
    %s605 = scalar_lea.vmem %s7, 2
    %v606 = vld [vmem:[%s605] sm:$0x1]
    %v608 = vperm.slane %v606, 0
    %610 = vmatpush.msra.mxu0 0.0
    %611 = vmatpush.msra.mxu0 0.0
    %612 = vmatpush.msra.mxu0 0.0
    %613 = vmatpush.msra.mxu0 0.0
    %614 = vmatpush.msra.mxu0 0.0
    %615 = vmatpush.msra.mxu0 0.0
    %616 = vmatpush.msra.mxu0 0.0
    %617 = vmatpush.msra.mxu0 0.0
    %618 = vmatpush.msra.mxu0 0.0
    %619 = vmatpush.msra.mxu0 0.0
    %620 = vmatpush.msra.mxu0 0.0
    %621 = vmatpush.msra.mxu0 0.0
    %622 = vmatpush.msra.mxu0 %v604
    %623 = vmatpush.msra.mxu0 %v603
    %624 = vmatpush.msra.mxu0 %v602
    %625 = vmatpush.msra.mxu0 %v601
    %626 = vmatmul.f32.gmra.mxu0 %v51
    %v627 = vpop.f32.mrf.mxu0
    %v628 = vadd.f32 %v608, %v627
    %629 = vmatmul.f32.gmra.mxu0 %v54
    %v630 = vpop.f32.mrf.mxu0
    %v631 = vadd.f32 %v608, %v630
    %632 = vdwg.mxu0
    %v634 = vsel %vm141, %v562, 0
    %v637 = vsel %vm141, %v565, 0
    %v640 = vsel %vm141, %v595, 0
    %v643 = vsel %vm141, %v598, 0
    %645 = vmatpush.xpose.msra.mxu0 0.0
    %646 = vmatpush.xpose.msra.mxu0 0.0
    %647 = vmatpush.xpose.msra.mxu0 0.0
    %648 = vmatpush.xpose.msra.mxu0 0.0
    %649 = vmatpush.xpose.msra.mxu0 0.0
    %650 = vmatpush.xpose.msra.mxu0 0.0
    %651 = vmatpush.xpose.msra.mxu0 0.0
    %652 = vmatpush.xpose.msra.mxu0 0.0
    %653 = vmatpush.xpose.msra.mxu0 0.0
    %654 = vmatpush.xpose.msra.mxu0 0.0
    %655 = vmatpush.xpose.msra.mxu0 0.0
    %656 = vmatpush.xpose.msra.mxu0 0.0
    %657 = vmatpush.xpose.msra.mxu0 0.0
    %658 = vmatpush.xpose.msra.mxu0 0.0
    %659 = vmatpush.xpose.msra.mxu0 %v643
    %660 = vmatpush.xpose.msra.mxu0 %v640
    %661 = vmatmul.f32.gmra.mxu0 %v634
    %v662 = vpop.f32.mrf.mxu0
    %v663 = vadd.f32 %v38, %v662
    %664 = vmatmul.f32.gmra.mxu0 %v637
    %v665 = vpop.f32.mrf.mxu0
    %v666 = vadd.f32 %v39, %v665
    %667 = vdwg.mxu0
    %v668 = vsel %vm177, %v663, -inf
    %669 = vmax.xlane.f32.xlu0 %v668
    %v670 = vpop.xlane.xlu0 %669
    %v671 = vsel %vm177, %v666, -inf
    %672 = vmax.xlane.f32.xlu0 %v671
    %v673 = vpop.xlane.xlu0 %672
    %v674 = vsub.f32 %v663, %v670
    %v675 = vsub.f32 %v666, %v673
    %v676 = vmul.f32 %v674, 1.442695
    %v677 = vpow.pop %v676
    %v678 = vmul.f32 %v675, 1.442695
    %v679 = vpow.pop %v678
    %v680 = vsel %vm177, %v677, 0.0
    %681 = vadd.xlane.f32.xlu0 %v680
    %v682 = vpop.xlane.xlu0 %681
    %v683 = vsel %vm177, %v679, 0.0
    %684 = vadd.xlane.f32.xlu0 %v683
    %v685 = vpop.xlane.xlu0 %684
    %v686 = vrcp.pop %v682
    %v687 = vmul.f32 %v682, %v686
    %v688 = vsub.f32 1.0, %v687
    %v689 = vmul.f32 %v686, %v688
    %v690 = vadd.f32 %v686, %v689
    %vm691 = vweird.f32 %v682
    %vm692 = vweird.f32 %v686
    %vm693 = vmor %vm691, %vm692
    %v694 = vsel %vm693, %v686, %v690
    %v695 = vand.u32 2147483647, %v682
    %vm696 = vcmp.eq.f32.partialorder %v695, 8.507059e+37
    %v697 = vand.u32 %v682, 2147483648
    %v698 = vor.u32 1.1754944e-38, %v697
    %v699 = vsel %vm696, %v698, %v694
    %v700 = vmul.f32 %v677, %v699
    %v701 = vrcp.pop %v685
    %v702 = vmul.f32 %v685, %v701
    %v703 = vsub.f32 1.0, %v702
    %v704 = vmul.f32 %v701, %v703
    %v705 = vadd.f32 %v701, %v704
    %vm706 = vweird.f32 %v685
    %vm707 = vweird.f32 %v701
    %vm708 = vmor %vm706, %vm707
    %v709 = vsel %vm708, %v701, %v705
    %v710 = vand.u32 2147483647, %v685
    %vm711 = vcmp.eq.f32.partialorder %v710, 8.507059e+37
    %v712 = vand.u32 %v685, 2147483648
    %v713 = vor.u32 1.1754944e-38, %v712
    %v714 = vsel %vm711, %v713, %v709
    %v715 = vmul.f32 %v679, %v714
    %v717 = vsel %vm177, %v700, 0
    %v720 = vsel %vm177, %v715, 0
    %722 = vmatpush.msra.mxu0 0.0
    %723 = vmatpush.msra.mxu0 0.0
    %724 = vmatpush.msra.mxu0 0.0
    %725 = vmatpush.msra.mxu0 0.0
    %726 = vmatpush.msra.mxu0 0.0
    %727 = vmatpush.msra.mxu0 0.0
    %728 = vmatpush.msra.mxu0 0.0
    %729 = vmatpush.msra.mxu0 0.0
    %730 = vmatpush.msra.mxu0 0.0
    %731 = vmatpush.msra.mxu0 0.0
    %732 = vmatpush.msra.mxu0 0.0
    %733 = vmatpush.msra.mxu0 0.0
    %734 = vmatpush.msra.mxu0 0.0
    %735 = vmatpush.msra.mxu0 0.0
    %736 = vmatpush.msra.mxu0 %v631
    %737 = vmatpush.msra.mxu0 %v628
    %738 = vmatmul.f32.gmra.mxu0 %v717
    %v739 = vpop.f32.mrf.mxu0
    %v740 = vadd.f32 0.0, %v739
    %741 = vmatmul.f32.gmra.mxu0 %v720
    %v742 = vpop.f32.mrf.mxu0
    %v743 = vadd.f32 0.0, %v742
    %744 = vdwg.mxu0
    %s745 = scalar_lea.vmem %s8, 16
    %v746 = vld [vmem:[%s745] sm:$0xff]
    %v748 = vsel %vm141, %v740, 0
    %v751 = vsel %vm141, %v743, 0
    %753 = vmatpush.msra.mxu0 0.0
    %754 = vmatpush.msra.mxu0 0.0
    %755 = vmatpush.msra.mxu0 0.0
    %756 = vmatpush.msra.mxu0 0.0
    %757 = vmatpush.msra.mxu0 0.0
    %758 = vmatpush.msra.mxu0 0.0
    %759 = vmatpush.msra.mxu0 0.0
    %760 = vmatpush.msra.mxu0 0.0
    %761 = vmatpush.msra.mxu0 0.0
    %762 = vmatpush.msra.mxu0 0.0
    %763 = vmatpush.msra.mxu0 0.0
    %764 = vmatpush.msra.mxu0 0.0
    %765 = vmatpush.msra.mxu0 0.0
    %766 = vmatpush.msra.mxu0 0.0
    %767 = vmatpush.msra.mxu0 0.0
    %768 = vmatpush.msra.mxu0 %v746
    %769 = vmatmul.f32.gmra.mxu0 %v748
    %v770 = vpop.f32.mrf.mxu0
    %v771 = vadd.f32 0.0, %v770
    %772 = vmatmul.f32.gmra.mxu0 %v751
    %v773 = vpop.f32.mrf.mxu0
    %v774 = vadd.f32 0.0, %v773
    %775 = vdwg.mxu0
    %v776 = vadd.f32 %v532, %v771
    %v777 = vadd.f32 %v533, %v774
    %s778 = scalar_lea.vmem %s2, 96
    %v779 = vld [vmem:[%s778] sm:$0xff]
    %v780 = vld [vmem:[%s778 + $0x8] sm:$0xff]
    %v781 = vld [vmem:[%s778 + $0x10] sm:$0xff]
    %v782 = vld [vmem:[%s778 + $0x18] sm:$0xff]
    %s783 = scalar_lea.vmem %s5, 3
    %v784 = vld [vmem:[%s783] sm:$0x1]
    %v786 = vperm.slane %v784, 0
    %788 = vmatpush.msra.mxu0 0.0
    %789 = vmatpush.msra.mxu0 0.0
    %790 = vmatpush.msra.mxu0 0.0
    %791 = vmatpush.msra.mxu0 0.0
    %792 = vmatpush.msra.mxu0 0.0
    %793 = vmatpush.msra.mxu0 0.0
    %794 = vmatpush.msra.mxu0 0.0
    %795 = vmatpush.msra.mxu0 0.0
    %796 = vmatpush.msra.mxu0 0.0
    %797 = vmatpush.msra.mxu0 0.0
    %798 = vmatpush.msra.mxu0 0.0
    %799 = vmatpush.msra.mxu0 0.0
    %800 = vmatpush.msra.mxu0 %v782
    %801 = vmatpush.msra.mxu0 %v781
    %802 = vmatpush.msra.mxu0 %v780
    %803 = vmatpush.msra.mxu0 %v779
    %804 = vmatmul.f32.gmra.mxu0 %v51
    %v805 = vpop.f32.mrf.mxu0
    %v806 = vadd.f32 %v786, %v805
    %807 = vmatmul.f32.gmra.mxu0 %v54
    %v808 = vpop.f32.mrf.mxu0
    %v809 = vadd.f32 %v786, %v808
    %810 = vdwg.mxu0
    %s811 = scalar_lea.vmem %s3, 96
    %v812 = vld [vmem:[%s811] sm:$0xff]
    %v813 = vld [vmem:[%s811 + $0x8] sm:$0xff]
    %v814 = vld [vmem:[%s811 + $0x10] sm:$0xff]
    %v815 = vld [vmem:[%s811 + $0x18] sm:$0xff]
    %s816 = scalar_lea.vmem %s6, 3
    %v817 = vld [vmem:[%s816] sm:$0x1]
    %v819 = vperm.slane %v817, 0
    %821 = vmatpush.msra.mxu0 0.0
    %822 = vmatpush.msra.mxu0 0.0
    %823 = vmatpush.msra.mxu0 0.0
    %824 = vmatpush.msra.mxu0 0.0
    %825 = vmatpush.msra.mxu0 0.0
    %826 = vmatpush.msra.mxu0 0.0
    %827 = vmatpush.msra.mxu0 0.0
    %828 = vmatpush.msra.mxu0 0.0
    %829 = vmatpush.msra.mxu0 0.0
    %830 = vmatpush.msra.mxu0 0.0
    %831 = vmatpush.msra.mxu0 0.0
    %832 = vmatpush.msra.mxu0 0.0
    %833 = vmatpush.msra.mxu0 %v815
    %834 = vmatpush.msra.mxu0 %v814
    %835 = vmatpush.msra.mxu0 %v813
    %836 = vmatpush.msra.mxu0 %v812
    %837 = vmatmul.f32.gmra.mxu0 %v51
    %v838 = vpop.f32.mrf.mxu0
    %v839 = vadd.f32 %v819, %v838
    %840 = vmatmul.f32.gmra.mxu0 %v54
    %v841 = vpop.f32.mrf.mxu0
    %v842 = vadd.f32 %v819, %v841
    %843 = vdwg.mxu0
    %s844 = scalar_lea.vmem %s4, 96
    %v845 = vld [vmem:[%s844] sm:$0xff]
    %v846 = vld [vmem:[%s844 + $0x8] sm:$0xff]
    %v847 = vld [vmem:[%s844 + $0x10] sm:$0xff]
    %v848 = vld [vmem:[%s844 + $0x18] sm:$0xff]
    %s849 = scalar_lea.vmem %s7, 3
    %v850 = vld [vmem:[%s849] sm:$0x1]
    %v852 = vperm.slane %v850, 0
    %854 = vmatpush.msra.mxu0 0.0
    %855 = vmatpush.msra.mxu0 0.0
    %856 = vmatpush.msra.mxu0 0.0
    %857 = vmatpush.msra.mxu0 0.0
    %858 = vmatpush.msra.mxu0 0.0
    %859 = vmatpush.msra.mxu0 0.0
    %860 = vmatpush.msra.mxu0 0.0
    %861 = vmatpush.msra.mxu0 0.0
    %862 = vmatpush.msra.mxu0 0.0
    %863 = vmatpush.msra.mxu0 0.0
    %864 = vmatpush.msra.mxu0 0.0
    %865 = vmatpush.msra.mxu0 0.0
    %866 = vmatpush.msra.mxu0 %v848
    %867 = vmatpush.msra.mxu0 %v847
    %868 = vmatpush.msra.mxu0 %v846
    %869 = vmatpush.msra.mxu0 %v845
    %870 = vmatmul.f32.gmra.mxu0 %v51
    %v871 = vpop.f32.mrf.mxu0
    %v872 = vadd.f32 %v852, %v871
    %873 = vmatmul.f32.gmra.mxu0 %v54
    %v874 = vpop.f32.mrf.mxu0
    %v875 = vadd.f32 %v852, %v874
    %876 = vdwg.mxu0
    %v878 = vsel %vm141, %v806, 0
    %v881 = vsel %vm141, %v809, 0
    %v884 = vsel %vm141, %v839, 0
    %v887 = vsel %vm141, %v842, 0
    %889 = vmatpush.xpose.msra.mxu0 0.0
    %890 = vmatpush.xpose.msra.mxu0 0.0
    %891 = vmatpush.xpose.msra.mxu0 0.0
    %892 = vmatpush.xpose.msra.mxu0 0.0
    %893 = vmatpush.xpose.msra.mxu0 0.0
    %894 = vmatpush.xpose.msra.mxu0 0.0
    %895 = vmatpush.xpose.msra.mxu0 0.0
    %896 = vmatpush.xpose.msra.mxu0 0.0
    %897 = vmatpush.xpose.msra.mxu0 0.0
    %898 = vmatpush.xpose.msra.mxu0 0.0
    %899 = vmatpush.xpose.msra.mxu0 0.0
    %900 = vmatpush.xpose.msra.mxu0 0.0
    %901 = vmatpush.xpose.msra.mxu0 0.0
    %902 = vmatpush.xpose.msra.mxu0 0.0
    %903 = vmatpush.xpose.msra.mxu0 %v887
    %904 = vmatpush.xpose.msra.mxu0 %v884
    %905 = vmatmul.f32.gmra.mxu0 %v878
    %v906 = vpop.f32.mrf.mxu0
    %v907 = vadd.f32 %v38, %v906
    %908 = vmatmul.f32.gmra.mxu0 %v881
    %v909 = vpop.f32.mrf.mxu0
    %v910 = vadd.f32 %v39, %v909
    %911 = vdwg.mxu0
    %v912 = vsel %vm177, %v907, -inf
    %913 = vmax.xlane.f32.xlu0 %v912
    %v914 = vpop.xlane.xlu0 %913
    %v915 = vsel %vm177, %v910, -inf
    %916 = vmax.xlane.f32.xlu0 %v915
    %v917 = vpop.xlane.xlu0 %916
    %v918 = vsub.f32 %v907, %v914
    %v919 = vsub.f32 %v910, %v917
    %v920 = vmul.f32 %v918, 1.442695
    %v921 = vpow.pop %v920
    %v922 = vmul.f32 %v919, 1.442695
    %v923 = vpow.pop %v922
    %v924 = vsel %vm177, %v921, 0.0
    %925 = vadd.xlane.f32.xlu0 %v924
    %v926 = vpop.xlane.xlu0 %925
    %v927 = vsel %vm177, %v923, 0.0
    %928 = vadd.xlane.f32.xlu0 %v927
    %v929 = vpop.xlane.xlu0 %928
    %v930 = vrcp.pop %v926
    %v931 = vmul.f32 %v926, %v930
    %v932 = vsub.f32 1.0, %v931
    %v933 = vmul.f32 %v930, %v932
    %v934 = vadd.f32 %v930, %v933
    %vm935 = vweird.f32 %v926
    %vm936 = vweird.f32 %v930
    %vm937 = vmor %vm935, %vm936
    %v938 = vsel %vm937, %v930, %v934
    %v939 = vand.u32 2147483647, %v926
    %vm940 = vcmp.eq.f32.partialorder %v939, 8.507059e+37
    %v941 = vand.u32 %v926, 2147483648
    %v942 = vor.u32 1.1754944e-38, %v941
    %v943 = vsel %vm940, %v942, %v938
    %v944 = vmul.f32 %v921, %v943
    %v945 = vrcp.pop %v929
    %v946 = vmul.f32 %v929, %v945
    %v947 = vsub.f32 1.0, %v946
    %v948 = vmul.f32 %v945, %v947
    %v949 = vadd.f32 %v945, %v948
    %vm950 = vweird.f32 %v929
    %vm951 = vweird.f32 %v945
    %vm952 = vmor %vm950, %vm951
    %v953 = vsel %vm952, %v945, %v949
    %v954 = vand.u32 2147483647, %v929
    %vm955 = vcmp.eq.f32.partialorder %v954, 8.507059e+37
    %v956 = vand.u32 %v929, 2147483648
    %v957 = vor.u32 1.1754944e-38, %v956
    %v958 = vsel %vm955, %v957, %v953
    %v959 = vmul.f32 %v923, %v958
    %v961 = vsel %vm177, %v944, 0
    %v964 = vsel %vm177, %v959, 0
    %966 = vmatpush.msra.mxu0 0.0
    %967 = vmatpush.msra.mxu0 0.0
    %968 = vmatpush.msra.mxu0 0.0
    %969 = vmatpush.msra.mxu0 0.0
    %970 = vmatpush.msra.mxu0 0.0
    %971 = vmatpush.msra.mxu0 0.0
    %972 = vmatpush.msra.mxu0 0.0
    %973 = vmatpush.msra.mxu0 0.0
    %974 = vmatpush.msra.mxu0 0.0
    %975 = vmatpush.msra.mxu0 0.0
    %976 = vmatpush.msra.mxu0 0.0
    %977 = vmatpush.msra.mxu0 0.0
    %978 = vmatpush.msra.mxu0 0.0
    %979 = vmatpush.msra.mxu0 0.0
    %980 = vmatpush.msra.mxu0 %v875
    %981 = vmatpush.msra.mxu0 %v872
    %982 = vmatmul.f32.gmra.mxu0 %v961
    %v983 = vpop.f32.mrf.mxu0
    %v984 = vadd.f32 0.0, %v983
    %985 = vmatmul.f32.gmra.mxu0 %v964
    %v986 = vpop.f32.mrf.mxu0
    %v987 = vadd.f32 0.0, %v986
    %988 = vdwg.mxu0
    %s989 = scalar_lea.vmem %s8, 24
    %v990 = vld [vmem:[%s989] sm:$0xff]
    %v992 = vsel %vm141, %v984, 0
    %v995 = vsel %vm141, %v987, 0
    %997 = vmatpush.msra.mxu0 0.0
    %998 = vmatpush.msra.mxu0 0.0
    %999 = vmatpush.msra.mxu0 0.0
    %1000 = vmatpush.msra.mxu0 0.0
    %1001 = vmatpush.msra.mxu0 0.0
    %1002 = vmatpush.msra.mxu0 0.0
    %1003 = vmatpush.msra.mxu0 0.0
    %1004 = vmatpush.msra.mxu0 0.0
    %1005 = vmatpush.msra.mxu0 0.0
    %1006 = vmatpush.msra.mxu0 0.0
    %1007 = vmatpush.msra.mxu0 0.0
    %1008 = vmatpush.msra.mxu0 0.0
    %1009 = vmatpush.msra.mxu0 0.0
    %1010 = vmatpush.msra.mxu0 0.0
    %1011 = vmatpush.msra.mxu0 0.0
    %1012 = vmatpush.msra.mxu0 %v990
    %1013 = vmatmul.f32.gmra.mxu0 %v992
    %v1014 = vpop.f32.mrf.mxu0
    %v1015 = vadd.f32 0.0, %v1014
    %1016 = vmatmul.f32.gmra.mxu0 %v995
    %v1017 = vpop.f32.mrf.mxu0
    %v1018 = vadd.f32 0.0, %v1017
    %1019 = vdwg.mxu0
    %v1020 = vadd.f32 %v776, %v1015
    %v1021 = vadd.f32 %v777, %v1018
    %1022 = vst.msk [vmem:[#allocation2] sm:$0xff] %vm49, %v1020
    %1023 = vst.msk [vmem:[#allocation2 + $0x8] sm:$0xff] %vm49, %v1021
    // Predicated region
    $region42: #{tpu_custom_call.1} parent=1 // pred_check
      _
    $region43: #{tpu_custom_call.1} parent=1 // pred_check_branch
      %1025 = sbr.rel (0) target = $region45
    $region44: #{tpu_custom_call.1} parent=1 // pred_region
      %1027 = vsyncadd [#allocation3], 0
      %s1028 = sshll.u32 [#allocation2], 4
      %s1029 = int_to_ptr.vmem [resolvable:$true] %s1028
      %s1030 = sshll.u32 %s10, 4
      %s1031 = int_to_ptr.hbm [resolvable:$true] %s1030
      %1036 = dma.vmem_to_hbm [thread:$0]  %s1029, 256, %s1031, [#allocation3], 128, 128, 8
    $region45: #{tpu_custom_call.1} parent=1 // pred_fallthru
      _
    // Predicated region
    $region46: #{tpu_custom_call.1} parent=1 // pred_check
      _
    $region47: #{tpu_custom_call.1} parent=1 // pred_check_branch
      %1038 = sbr.rel (0) target = $region49
    $region48: #{tpu_custom_call.1} parent=1 // pred_region
      %1040 = dma.done [#allocation3], 256
    $region49: #{tpu_custom_call.1} parent=1 // pred_fallthru
      _
    %1041 = vsyncpa [#allocation3], 1

</llo_original>
